<compile_context>
chip_gen: v6e
topology: v6e:2x2x1
jax: 0.10.0
libtpu: 0.0.40
codegen_flags: <defaults>
</compile_context>

<pallas_src>
import functools

import jax
import jax.numpy as jnp
from jax.experimental import pallas as pl
from jax.experimental.pallas import tpu as pltpu


def _attn_lastdim_kernel(x_ref, w1_ref, w2_ref, b2_ref, o_ref, acc_ref, *, inv_t):
    # x_ref : (b_blk, D, t_blk)   w1_ref : (D, H)   w2_ref : (H, D)
    # b2_ref: (1, D)              o_ref  : (b_blk, D)
    # acc_ref: (b_blk, D) f32 scratch, persistent across the T grid axis.
    t = pl.program_id(1)

    @pl.when(t == 0)
    def _init():
        acc_ref[...] = jnp.zeros_like(acc_ref)

    # Partial sum over this T tile, accumulated in f32 (handles bf16 inputs).
    # The cross-lane reduce is tiny relative to the HBM stream and hides
    # under the next tile's DMA.
    x = x_ref[...].astype(jnp.float32)
    acc_ref[...] += jnp.sum(x, axis=-1)

    @pl.when(t == pl.num_programs(1) - 1)
    def _epilogue():
        # Mean + tiny MLP run once per output tile (negligible FLOPs).
        xm = acc_ref[...] * inv_t                                     # (b_blk, D)
        w1 = w1_ref[...].astype(jnp.float32)
        w2 = w2_ref[...].astype(jnp.float32)
        b2 = b2_ref[...].astype(jnp.float32)
        h = jnp.dot(xm, w1, preferred_element_type=jnp.float32)       # (b_blk, H)
        h = jnp.maximum(h, 0.0)                                       # ReLU
        y = jnp.dot(h, w2, preferred_element_type=jnp.float32) + b2   # (b_blk, D)
        o_ref[...] = jax.nn.sigmoid(y).astype(o_ref.dtype)            # Sigmoid


def _choose_tile(total, *, multiple, cap):
    """Largest divisor of `total` that is a multiple of `multiple` and <= cap."""
    best = None
    d = multiple
    hi = min(total, cap)
    while d <= hi:
        if total % d == 0:
            best = d
        d += multiple
    return best


def attention_lastdim(x, w1, w2, b2, *, b_blk=None, t_blk=None,
                      x_tile_budget_bytes=6 << 20):
    """x: (B, D, T); w1: (D, H); w2: (H, D); b2: (D,) -> (B, D, 1)."""
    B, D, T = x.shape
    H = w1.shape[1]

    # --- tile selection ---------------------------------------------------
    if b_blk is None:
        if B <= 256:
            b_blk = B
        else:
            b_blk = _choose_tile(B, multiple=8, cap=256) or B

    if t_blk is None:
        itemsize = jnp.dtype(x.dtype).itemsize
        bytes_per_col = max(b_blk * D * itemsize, 1)
        cap = max(128, x_tile_budget_bytes // bytes_per_col)
        # Lane-dense (multiple of 128) T tiles when possible, else full T.
        t_blk = _choose_tile(T, multiple=128, cap=cap) or T

    assert B % b_blk == 0 and T % t_blk == 0, "tiles must divide (B, T)"

    grid = (B // b_blk, T // t_blk)  # reduction (T) axis last, "arbitrary"
    b2_2d = b2.reshape(1, D)

    kernel = functools.partial(_attn_lastdim_kernel, inv_t=1.0 / T)

    out = pl.pallas_call(
        kernel,
        out_shape=jax.ShapeDtypeStruct((B, D), x.dtype),
        grid_spec=pltpu.PrefetchScalarGridSpec(
            num_scalar_prefetch=0,
            grid=grid,
            in_specs=[
                # x is streamed tile-by-tile (auto double-buffered).
                pl.BlockSpec((b_blk, D, t_blk), lambda b, t: (b, 0, t)),
                # Weights/bias: constant block index -> resident across grid.
                pl.BlockSpec((D, H), lambda b, t: (0, 0)),
                pl.BlockSpec((H, D), lambda b, t: (0, 0)),
                pl.BlockSpec((1, D), lambda b, t: (0, 0)),
            ],
            # Same output block across the T axis -> written once at epilogue.
            out_specs=pl.BlockSpec((b_blk, D), lambda b, t: (b, 0)),
            scratch_shapes=[pltpu.VMEM((b_blk, D), jnp.float32)],
        ),
        compiler_params=pltpu.CompilerParams(
            dimension_semantics=("parallel", "arbitrary"),
            vmem_limit_bytes=32 * 1024 * 1024,  # safe on v5e/v6e/v7x
        ),
    )(x, w1, w2, b2_2d)

    return out[..., None]  # unsqueeze(-1): (B, D, 1)


def init_params(key, input_dim, hid_dim):
    """nn.Linear-style init. First Linear: bias=False (matches the module);
    second Linear: weight + bias. Weights stored transposed for x @ W."""
    k1, k2, k3 = jax.random.split(key, 3)
    bound1 = 1.0 / jnp.sqrt(input_dim)
    bound2 = 1.0 / jnp.sqrt(hid_dim)
    w1 = jax.random.uniform(k1, (input_dim, hid_dim), jnp.float32, -bound1, bound1)
    w2 = jax.random.uniform(k2, (hid_dim, input_dim), jnp.float32, -bound2, bound2)
    b2 = jax.random.uniform(k3, (input_dim,), jnp.float32, -bound2, bound2)
    return w1, w2, b2


def _reference(x, w1, w2, b2):
    xm = jnp.mean(x.astype(jnp.float32), axis=-1)
    h = jnp.maximum(xm @ w1, 0.0)
    return jax.nn.sigmoid(h @ w2 + b2)[..., None].astype(x.dtype)


if __name__ == "__main__":
    key = jax.random.PRNGKey(0)

    # --- Case 1: lane-dense tiled reduction (multi-step T grid) -------------
    B, D, T, H = 8, 128, 1024, 64
    kx, kp = jax.random.split(key)
    x = jax.random.normal(kx, (B, D, T), dtype=jnp.float32)
    w1, w2, b2 = init_params(kp, D, H)

    out = attention_lastdim(x, w1, w2, b2, t_blk=256)   # grid = (1, 4)
    out = jax.block_until_ready(out)
    ref = _reference(x, w1, w2, b2)
    assert out.shape == (B, D, 1)
    assert jnp.allclose(out, ref, atol=1e-5, rtol=1e-5)

    # --- Case 2: tiny / odd shapes fall back to full-array blocks -----------
    B2, D2, T2, H2 = 2, 16, 8, 32
    kx2, kp2 = jax.random.split(jax.random.PRNGKey(1))
    x2 = jax.random.normal(kx2, (B2, D2, T2), dtype=jnp.float32)
    w1b, w2b, b2b = init_params(kp2, D2, H2)

    out2 = attention_lastdim(x2, w1b, w2b, b2b)          # grid = (1, 1)
    out2 = jax.block_until_ready(out2)
    ref2 = _reference(x2, w1b, w2b, b2b)
    assert out2.shape == (B2, D2, 1)
    assert jnp.allclose(out2, ref2, atol=1e-5, rtol=1e-5)

    # --- Case 3: bf16 input, f32 accumulation inside the kernel -------------
    B3, D3, T3, H3 = 4, 128, 512, 64
    kx3, kp3 = jax.random.split(jax.random.PRNGKey(2))
    x3 = jax.random.normal(kx3, (B3, D3, T3), dtype=jnp.float32).astype(jnp.bfloat16)
    w1c, w2c, b2c = init_params(kp3, D3, H3)

    out3 = attention_lastdim(x3, w1c, w2c, b2c, t_blk=128)  # grid = (1, 4)
    out3 = jax.block_until_ready(out3)
    ref3 = _reference(x3, w1c, w2c, b2c)
    assert out3.shape == (B3, D3, 1)
    assert jnp.allclose(out3.astype(jnp.float32), ref3.astype(jnp.float32),
                        atol=1e-2, rtol=1e-2)

    print("KERNEL_OK")
</pallas_src>

<mosaic_0001>
module attributes {stable_mosaic.version = 11 : i64} {
  func.func @_attn_lastdim_kernel(%arg0: i32, %arg1: i32, %arg2: memref<8x128x256xf32, #tpu.memory_space<vmem>>, %arg3: memref<128x64xf32, #tpu.memory_space<vmem>>, %arg4: memref<64x128xf32, #tpu.memory_space<vmem>>, %arg5: memref<1x128xf32, #tpu.memory_space<vmem>>, %arg6: memref<8x128xf32, #tpu.memory_space<vmem>>, %arg7: memref<8x128xf32, #tpu.memory_space<vmem>>) attributes {dimension_semantics = [#tpu.dimension_semantics<parallel>, #tpu.dimension_semantics<arbitrary>], iteration_bounds = array<i64: 1, 4>, scalar_prefetch = 0 : i64, scratch_operands = 1 : i64, tpu.core_type = #tpu.core_type<tc>, window_params = [{transform_indices = @transform_0, window_bounds = array<i64: 8, 128, 256>}, {pipeline_mode = #tpu.pipeline_mode<synchronous>, transform_indices = @transform_1, window_bounds = array<i64: 128, 64>}, {pipeline_mode = #tpu.pipeline_mode<synchronous>, transform_indices = @transform_2, window_bounds = array<i64: 64, 128>}, {pipeline_mode = #tpu.pipeline_mode<synchronous>, transform_indices = @transform_3, window_bounds = array<i64: 1, 128>}, {transform_indices = @transform_4, window_bounds = array<i64: 8, 128>}]} {
    %c0_i32 = arith.constant 0 : i32
    %0 = arith.cmpi eq, %arg1, %c0_i32 : i32
    %1 = arith.extui %0 : i1 to i32
    %c0_i32_0 = arith.constant 0 : i32
    %2 = arith.cmpi ne, %1, %c0_i32_0 : i32
    scf.if %2 {
      %cst_8 = arith.constant 0.000000e+00 : f32
      %11 = vector.broadcast %cst_8 : f32 to vector<8x128xf32>
      %c0_9 = arith.constant 0 : index
      %c0_10 = arith.constant 0 : index
      %12 = vector.load %arg7[%c0_9, %c0_10] : memref<8x128xf32, #tpu.memory_space<vmem>>, vector<8x128xf32>
      tpu.vector_store %arg7[%c0_9, %c0_10], %11 {strides = array<i32>} : memref<8x128xf32, #tpu.memory_space<vmem>>, vector<8x128xf32>,
    } else {
    }
    %c0 = arith.constant 0 : index
    %c0_1 = arith.constant 0 : index
    %c0_2 = arith.constant 0 : index
    %3 = vector.load %arg2[%c0, %c0_1, %c0_2] : memref<8x128x256xf32, #tpu.memory_space<vmem>>, vector<8x128x256xf32>
    %c0_3 = arith.constant 0 : index
    %c0_4 = arith.constant 0 : index
    %4 = vector.load %arg7[%c0_3, %c0_4] : memref<8x128xf32, #tpu.memory_space<vmem>>, vector<8x128xf32>
    %cst = arith.constant dense<0.000000e+00> : vector<8x128xf32>
    %5 = vector.multi_reduction <add>, %3, %cst [2] : vector<8x128x256xf32> to vector<8x128xf32>
    %6 = arith.addf %4, %5 : vector<8x128xf32>
    %c0_5 = arith.constant 0 : index
    %c0_6 = arith.constant 0 : index
    %7 = vector.load %arg7[%c0_5, %c0_6] : memref<8x128xf32, #tpu.memory_space<vmem>>, vector<8x128xf32>
    tpu.vector_store %arg7[%c0_5, %c0_6], %6 {strides = array<i32>} : memref<8x128xf32, #tpu.memory_space<vmem>>, vector<8x128xf32>,
    %c3_i32 = arith.constant 3 : i32
    %8 = arith.cmpi eq, %arg1, %c3_i32 : i32
    %9 = arith.extui %8 : i1 to i32
    %c0_i32_7 = arith.constant 0 : i32
    %10 = arith.cmpi ne, %9, %c0_i32_7 : i32
    scf.if %10 {
      %c0_8 = arith.constant 0 : index
      %c0_9 = arith.constant 0 : index
      %11 = vector.load %arg7[%c0_8, %c0_9] : memref<8x128xf32, #tpu.memory_space<vmem>>, vector<8x128xf32>
      %cst_10 = arith.constant 9.765625E-4 : f32
      %12 = vector.broadcast %cst_10 : f32 to vector<8x128xf32>
      %13 = arith.mulf %11, %12 : vector<8x128xf32>
      %c0_11 = arith.constant 0 : index
      %c0_12 = arith.constant 0 : index
      %14 = vector.load %arg3[%c0_11, %c0_12] : memref<128x64xf32, #tpu.memory_space<vmem>>, vector<128x64xf32>
      %c0_13 = arith.constant 0 : index
      %c0_14 = arith.constant 0 : index
      %15 = vector.load %arg4[%c0_13, %c0_14] : memref<64x128xf32, #tpu.memory_space<vmem>>, vector<64x128xf32>
      %c0_15 = arith.constant 0 : index
      %c0_16 = arith.constant 0 : index
      %16 = vector.load %arg5[%c0_15, %c0_16] : memref<1x128xf32, #tpu.memory_space<vmem>>, vector<1x128xf32>
      %cst_17 = arith.constant dense<0.000000e+00> : vector<8x64xf32>
      %17 = tpu.matmul %13, %14, %cst_17 {dimension_numbers = #tpu.dot_dimension_numbers<[1], [0], [0], [1], [0, 0, 1, 1], [], []>} : vector<8x128xf32>, vector<128x64xf32>, vector<8x64xf32> -> vector<8x64xf32>
      %cst_18 = arith.constant 0.000000e+00 : f32
      %18 = vector.broadcast %cst_18 : f32 to vector<8x64xf32>
      %19 = arith.maximumf %17, %18 : vector<8x64xf32>
      %cst_19 = arith.constant dense<0.000000e+00> : vector<8x128xf32>
      %20 = tpu.matmul %19, %15, %cst_19 {dimension_numbers = #tpu.dot_dimension_numbers<[1], [0], [0], [1], [0, 0, 1, 1], [], []>} : vector<8x64xf32>, vector<64x128xf32>, vector<8x128xf32> -> vector<8x128xf32>
      %21 = vector.broadcast %16 : vector<1x128xf32> to vector<8x128xf32>
      %22 = arith.addf %20, %21 : vector<8x128xf32>
      %23 = arith.negf %22 : vector<8x128xf32>
      %24 = math.exp %23 : vector<8x128xf32>
      %cst_20 = arith.constant 1.000000e+00 : f32
      %25 = vector.broadcast %cst_20 : f32 to vector<8x128xf32>
      %26 = arith.addf %25, %24 : vector<8x128xf32>
      %27 = arith.divf %25, %26 : vector<8x128xf32>
      %c0_21 = arith.constant 0 : index
      %c0_22 = arith.constant 0 : index
      %28 = vector.load %arg6[%c0_21, %c0_22] : memref<8x128xf32, #tpu.memory_space<vmem>>, vector<8x128xf32>
      tpu.vector_store %arg6[%c0_21, %c0_22], %27 {strides = array<i32>} : memref<8x128xf32, #tpu.memory_space<vmem>>, vector<8x128xf32>,
    } else {
    }
    return
  }
  func.func @transform_0(%arg0: i32, %arg1: i32) -> (i32, i32, i32) {
    %c0_i32 = arith.constant 0 : i32
    %c0_i32_0 = arith.constant 0 : i32
    return %arg0, %c0_i32, %arg1 : i32, i32, i32
  }
  func.func @transform_1(%arg0: i32, %arg1: i32) -> (i32, i32) {
    %c0_i32 = arith.constant 0 : i32
    %c0_i32_0 = arith.constant 0 : i32
    %c0_i32_1 = arith.constant 0 : i32
    return %c0_i32, %c0_i32_0 : i32, i32
  }
  func.func @transform_2(%arg0: i32, %arg1: i32) -> (i32, i32) {
    %c0_i32 = arith.constant 0 : i32
    %c0_i32_0 = arith.constant 0 : i32
    %c0_i32_1 = arith.constant 0 : i32
    return %c0_i32, %c0_i32_0 : i32, i32
  }
  func.func @transform_3(%arg0: i32, %arg1: i32) -> (i32, i32) {
    %c0_i32 = arith.constant 0 : i32
    %c0_i32_0 = arith.constant 0 : i32
    %c0_i32_1 = arith.constant 0 : i32
    return %c0_i32, %c0_i32_0 : i32, i32
  }
  func.func @transform_4(%arg0: i32, %arg1: i32) -> (i32, i32) {
    %c0_i32 = arith.constant 0 : i32
    %c0_i32_0 = arith.constant 0 : i32
    return %arg0, %c0_i32 : i32, i32
  }
}

</mosaic_0001>

<llo_original>
// kernel: tpu_custom_call.1
$region0: #{tpu_custom_call.1}
  #allocation0 [shape = 'u32[]', space=smem, size = 0x4, offset = 0x4, fixed_abs, tag = 'smem constant byte address 0x4 - core index']
  #allocation1 [shape = 'u32[144,128]{1,0:T(1,128)}', space=vmem, size = 0x12000, scoped, tag = 'internal scratch']
  #allocation2 [shape = 'f32[8,128]{1,0:T(8,128)}', space=vmem, size = 0x1000, scoped, tag = 'scratch operand']
  %s0 = inlined_call_operand.hbm [shape: f32[8,128,1024], index: 0, kind: input, shape index: {}]
  %s1 = inlined_call_operand.vmem [shape: f32[128,64], index: 1, kind: input, shape index: {}]
  %s2 = inlined_call_operand.hbm [shape: f32[64,128], index: 2, kind: input, shape index: {}]
  %s3 = inlined_call_operand.hbm [shape: f32[1,128], index: 3, kind: input, shape index: {}]
  %s4 = inlined_call_operand.hbm [shape: f32[8,128], index: 4, kind: output, shape index: {}]
  %s5 = sld [smem:[#allocation0]]
  $region69: #{tpu_custom_call.1} parent=0
    _
  %s7 = ssub.s32 1, %s5
  %s8 = scalar_select 0, %s7, %s5
  $region1: #{tpu_custom_call.1} parent=0
    #allocation3 [shape = 'u8[2097152]{0}', space=vmem, size = 0x200000, scoped, tag = 'input window, operand 0']
    #allocation4 [shape = 's32[2]{0}', space=sflag, size = 0x8, scoped, tag = 'scoped memory for tpu_custom_call.1']
    #allocation5 [shape = 's32[2]{0}', space=sflag, size = 0x8, scoped, tag = 'scoped memory for tpu_custom_call.1']
    #allocation6 [shape = 'u8[32768]{0}', space=vmem, size = 0x8000, scoped, tag = 'input window, operand 2, single buffered']
    #allocation7 [shape = 's32[1]{0}', space=sflag, size = 0x4, scoped, tag = 'scoped memory for tpu_custom_call.1']
    #allocation8 [shape = 'u8[512]{0}', space=vmem, size = 0x400, scoped, tag = 'input window, operand 3, single buffered']
    #allocation9 [shape = 'u8[4096]{0}', space=vmem, size = 0x1000, scoped, tag = 'output window, operand 0, single buffered']
    %9 = vsyncpa [#allocation4], 0
    %s10 = scalar_lea.sflag [#allocation4], 1
    %11 = vsyncpa %s10, 0
    %12 = vsyncpa [#allocation7], 0
    %13 = vsyncpa [#allocation5], 0
    loop: start=0, step=1, limit=6
    $region2: #{tpu_custom_call.1} parent=1 // loop_pre_header
      _
    $region3: #{tpu_custom_call.1} parent=1 // loop_header
      %s15 = sphi 0, %s19
      %p16 = scmp.ge.s32.totalorder %s15, 6
      %s22 = sphi 0, %s34
      %s23 = sphi 0, %s30
      %s24 = sphi 0, %s22
      %s25 = sphi 0, %s23
      %s26 = sphi 0, %s24
      %s27 = sphi 0, %s25
      %s39 = sphi 0, %s41
      %s42 = sphi 0, %s39
      %s43 = sphi 0, %s42
      %s59 = sphi 0, %s43
      %s63 = sphi 0, %s63
      %s65 = sphi 0, %s63
      %s66 = sphi 0, %s65
      %s80 = sphi 0, %s66
      %s84 = sphi 0, %s84
      %s86 = sphi 0, %s84
      %s87 = sphi 0, %s86
      %s101 = sphi 0, %s87
      %s105 = sphi 0, %s105
      %s107 = sphi 0, %s105
      %s108 = sphi 0, %s107
      %s122 = sphi 0, %s108
      %s128 = sphi 0, %s130
      %s131 = sphi 0, %s128
      %s132 = sphi 0, %s131
      %s148 = sphi 0, %s132
    $region4: #{tpu_custom_call.1} parent=1 // loop_header_branch
      %18 = sbr.rel (%p16) target = $region8
    $region5: #{tpu_custom_call.1} parent=1 // loop_body
      %s20 = ssub.s32 %s15, 1
      %s21 = ssub.s32 %s15, 2
      %s28 = sadd.s32 1, %s23
      %p29 = scmp.ge.s32.totalorder %s28, 4
      %s30 = scalar_select %p29, 0, %s28
      %s31 = sadd.s32 1, %s22
      %s32 = scalar_select %p29, %s31, %s22
      %p33 = scmp.ge.s32.totalorder %s32, 1
      %s34 = scalar_select %p33, 0, %s32
      %s35 = ssub.s32 %s22, %s34
      %s36 = ssub.s32 %s23, %s30
      %s37 = sor.u32 %s35, %s36
      %p38 = scmp.eq.s32.totalorder %s37, 0
      %s40 = sadd.s32 %s39, 1
      %s41 = scalar_select %p38, %s39, %s40
      %p44 = pneg %p38
      %p45 = scmp.eq.s32.totalorder %s15, 3
      %p46 = por %p44, %p45
      %p47 = scmp.ne.s32.totalorder %s39, %s42
      %p48 = scmp.eq.s32.totalorder %s15, 0
      %p49 = por %p47, %p48
      %p50 = scmp.ne.s32.totalorder %s39, %s42
      %p51 = scmp.eq.s32.totalorder %s20, 3
      %p52 = por %p50, %p51
      %p53 = scmp.ne.s32.totalorder %s42, %s43
      %p54 = scmp.eq.s32.totalorder %s20, 0
      %p55 = por %p53, %p54
      %p56 = scmp.ne.s32.totalorder %s42, %s43
      %p57 = scmp.eq.s32.totalorder %s21, 3
      %p58 = por %p56, %p57
      %p60 = scmp.ne.s32.totalorder %s43, %s59
      %p61 = scmp.eq.s32.totalorder %s21, 0
      %p62 = por %p60, %p61
      %s64 = sadd.s32 %s63, 1
      %p67 = scmp.eq.s32.totalorder %s15, 3
      %p68 = scmp.ne.s32.totalorder %s63, %s65
      %p69 = scmp.eq.s32.totalorder %s15, 0
      %p70 = por %p68, %p69
      %p71 = scmp.ne.s32.totalorder %s63, %s65
      %p72 = scmp.eq.s32.totalorder %s20, 3
      %p73 = por %p71, %p72
      %p74 = scmp.ne.s32.totalorder %s65, %s66
      %p75 = scmp.eq.s32.totalorder %s20, 0
      %p76 = por %p74, %p75
      %p77 = scmp.ne.s32.totalorder %s65, %s66
      %p78 = scmp.eq.s32.totalorder %s21, 3
      %p79 = por %p77, %p78
      %p81 = scmp.ne.s32.totalorder %s66, %s80
      %p82 = scmp.eq.s32.totalorder %s21, 0
      %p83 = por %p81, %p82
      %s85 = sadd.s32 %s84, 1
      %p88 = scmp.eq.s32.totalorder %s15, 3
      %p89 = scmp.ne.s32.totalorder %s84, %s86
      %p90 = scmp.eq.s32.totalorder %s15, 0
      %p91 = por %p89, %p90
      %p92 = scmp.ne.s32.totalorder %s84, %s86
      %p93 = scmp.eq.s32.totalorder %s20, 3
      %p94 = por %p92, %p93
      %p95 = scmp.ne.s32.totalorder %s86, %s87
      %p96 = scmp.eq.s32.totalorder %s20, 0
      %p97 = por %p95, %p96
      %p98 = scmp.ne.s32.totalorder %s86, %s87
      %p99 = scmp.eq.s32.totalorder %s21, 3
      %p100 = por %p98, %p99
      %p102 = scmp.ne.s32.totalorder %s87, %s101
      %p103 = scmp.eq.s32.totalorder %s21, 0
      %p104 = por %p102, %p103
      %s106 = sadd.s32 %s105, 1
      %p109 = scmp.eq.s32.totalorder %s15, 3
      %p110 = scmp.ne.s32.totalorder %s105, %s107
      %p111 = scmp.eq.s32.totalorder %s15, 0
      %p112 = por %p110, %p111
      %p113 = scmp.ne.s32.totalorder %s105, %s107
      %p114 = scmp.eq.s32.totalorder %s20, 3
      %p115 = por %p113, %p114
      %p116 = scmp.ne.s32.totalorder %s107, %s108
      %p117 = scmp.eq.s32.totalorder %s20, 0
      %p118 = por %p116, %p117
      %p119 = scmp.ne.s32.totalorder %s107, %s108
      %p120 = scmp.eq.s32.totalorder %s21, 3
      %p121 = por %p119, %p120
      %p123 = scmp.ne.s32.totalorder %s108, %s122
      %p124 = scmp.eq.s32.totalorder %s21, 0
      %p125 = por %p123, %p124
      %s126 = ssub.s32 %s22, %s34
      %p127 = scmp.eq.s32.totalorder %s126, 0
      %s129 = sadd.s32 %s128, 1
      %s130 = scalar_select %p127, %s128, %s129
      %p133 = pneg %p127
      %p134 = scmp.eq.s32.totalorder %s15, 3
      %p135 = por %p133, %p134
      %p136 = scmp.ne.s32.totalorder %s128, %s131
      %p137 = scmp.eq.s32.totalorder %s15, 0
      %p138 = por %p136, %p137
      %p139 = scmp.ne.s32.totalorder %s128, %s131
      %p140 = scmp.eq.s32.totalorder %s20, 3
      %p141 = por %p139, %p140
      %p142 = scmp.ne.s32.totalorder %s131, %s132
      %p143 = scmp.eq.s32.totalorder %s20, 0
      %p144 = por %p142, %p143
      %p145 = scmp.ne.s32.totalorder %s131, %s132
      %p146 = scmp.eq.s32.totalorder %s21, 3
      %p147 = por %p145, %p146
      %p149 = scmp.ne.s32.totalorder %s132, %s148
      %p150 = scmp.eq.s32.totalorder %s21, 0
      %p151 = por %p149, %p150
      %p152 = scmp.le.s32.totalorder 1, %s15
      %p153 = scmp.lt.s32.totalorder %s15, 5
      %p154 = pnand %p152, %p153
      %p155 = pneg %p154
      // Predicated region
      $region9: #{tpu_custom_call.1} parent=5 // pred_check
        _
      $region10: #{tpu_custom_call.1} parent=5 // pred_check_branch
        %157 = sbr.rel (%p154) target = $region12
      $region11: #{tpu_custom_call.1} parent=5 // pred_region
        %s158 = ssub.s32 %s15, 1
        // Predicated region
        $region13: #{tpu_custom_call.1} parent=11 // pred_check
          %p159 = pneg %p76
        $region14: #{tpu_custom_call.1} parent=11 // pred_check_branch
          %161 = sbr.rel (%p159) target = $region16
        $region15: #{tpu_custom_call.1} parent=11 // pred_region
          _
        $region16: #{tpu_custom_call.1} parent=11 // pred_fallthru
          _
        // Predicated region
        $region17: #{tpu_custom_call.1} parent=11 // pred_check
          %p162 = pneg %p97
        $region18: #{tpu_custom_call.1} parent=11 // pred_check_branch
          %164 = sbr.rel (%p162) target = $region20
        $region19: #{tpu_custom_call.1} parent=11 // pred_region
          %s166 = ssub.s32 1024, 1024
          %167 = vsyncadd [#allocation7], %s166
          %s168 = sshll.u32 [#allocation6], 4
          %s169 = int_to_ptr.vmem [resolvable:$true] %s168
          %174 = dma.hbm_to_vmem [thread:$0]  %s2, 1024, %s169, [#allocation7], 128, 128, 8
        $region20: #{tpu_custom_call.1} parent=11 // pred_fallthru
          _
        // Predicated region
        $region21: #{tpu_custom_call.1} parent=11 // pred_check
          %p175 = pneg %p118
        $region22: #{tpu_custom_call.1} parent=11 // pred_check_branch
          %177 = sbr.rel (%p175) target = $region24
        $region23: #{tpu_custom_call.1} parent=11 // pred_region
          %s179 = ssub.s32 16, 16
          %180 = vsyncadd [#allocation7], %s179
          %s182 = sshll.u32 [#allocation8], 4
          %s183 = int_to_ptr.vmem [resolvable:$true] %s182
          %185 = dma.hbm_to_vmem [thread:$0]  %s3, 16, %s183, [#allocation7]
        $region24: #{tpu_custom_call.1} parent=11 // pred_fallthru
          _
      $region12: #{tpu_custom_call.1} parent=5 // pred_fallthru
        _
      %p186 = scmp.lt.s32.totalorder %s15, 4
      // Predicated region
      $region25: #{tpu_custom_call.1} parent=5 // pred_check
        %p187 = pneg %p186
      $region26: #{tpu_custom_call.1} parent=5 // pred_check_branch
        %189 = sbr.rel (%p187) target = $region28
      $region27: #{tpu_custom_call.1} parent=5 // pred_region
        // Predicated region
        $region29: #{tpu_custom_call.1} parent=27 // pred_check
          %p190 = pneg %p49
        $region30: #{tpu_custom_call.1} parent=27 // pred_check_branch
          %192 = sbr.rel (%p190) target = $region32
        $region31: #{tpu_custom_call.1} parent=27 // pred_region
          %s193 = sand.u32 %s39, 1
          %s194 = scalar_lea.sflag [#allocation4], %s193
          %s195 = sand.u32 %s39, 1
          %s196 = smul.addr %s195, 2048
          %s197 = scalar_lea.vmem [#allocation3], %s196
          %s198 = smul.u32 8, %s22
          %s199 = smul.u32 2, %s23
          %s201 = ssub.s32 32768, 32768
          %202 = vsyncadd %s194, %s201
          %s203 = smul.addr %s198, 128
          %s204 = sadd.s32 %s199, %s203
          %s205 = smul.addr %s204, 128
          %s206 = scalar_lea.hbm %s0, %s205
          %s207 = sshll.u32 %s197, 4
          %s208 = int_to_ptr.vmem [resolvable:$true] %s207
          %213 = dma.hbm_to_vmem [thread:$0]  %s206, 32768, %s208, %s194, 1024, 256, 16
        $region32: #{tpu_custom_call.1} parent=27 // pred_fallthru
          _
      $region28: #{tpu_custom_call.1} parent=5 // pred_fallthru
        _
      %p214 = scmp.le.s32.totalorder 1, %s15
      %p215 = scmp.lt.s32.totalorder %s15, 5
      %p216 = pnand %p214, %p215
      %p217 = pneg %p216
      // Predicated region
      $region33: #{tpu_custom_call.1} parent=5 // pred_check
        _
      $region34: #{tpu_custom_call.1} parent=5 // pred_check_branch
        %219 = sbr.rel (%p216) target = $region36
      $region35: #{tpu_custom_call.1} parent=5 // pred_region
        %s220 = ssub.s32 %s15, 1
        %s221 = sand.u32 %s42, 1
        %s222 = scalar_lea.sflag [#allocation4], %s221
        %s223 = sand.u32 %s42, 1
        %s224 = smul.addr %s223, 2048
        %s225 = scalar_lea.vmem [#allocation3], %s224
        // Predicated region
        $region37: #{tpu_custom_call.1} parent=35 // pred_check
          %p226 = pneg %p55
        $region38: #{tpu_custom_call.1} parent=35 // pred_check_branch
          %228 = sbr.rel (%p226) target = $region40
        $region39: #{tpu_custom_call.1} parent=35 // pred_region
          %229 = dma.done %s222, 32768
        $region40: #{tpu_custom_call.1} parent=35 // pred_fallthru
          _
        // Predicated region
        $region41: #{tpu_custom_call.1} parent=35 // pred_check
          %p230 = pneg %p97
        $region42: #{tpu_custom_call.1} parent=35 // pred_check_branch
          %232 = sbr.rel (%p230) target = $region44
        $region43: #{tpu_custom_call.1} parent=35 // pred_region
          %233 = dma.done [#allocation7], 1024
        $region44: #{tpu_custom_call.1} parent=35 // pred_fallthru
          _
        // Predicated region
        $region45: #{tpu_custom_call.1} parent=35 // pred_check
          %p234 = pneg %p118
        $region46: #{tpu_custom_call.1} parent=35 // pred_check_branch
          %236 = sbr.rel (%p234) target = $region48
        $region47: #{tpu_custom_call.1} parent=35 // pred_region
          %237 = dma.done [#allocation7], 16
        $region48: #{tpu_custom_call.1} parent=35 // pred_fallthru
          _
        %s238 = sand.u32 %s42, 1
        %s239 = scalar_lea.sflag [#allocation4], %s238
        %s240 = sand.u32 %s42, 1
        %s241 = smul.addr %s240, 2048
        %s242 = scalar_lea.vmem [#allocation3], %s241
        %p243 = pneg %p55
        %p244 = pneg %p52
        %p245 = pneg %p76
        %p246 = pneg %p73
        %p247 = pneg %p97
        %p248 = pneg %p94
        %p249 = pneg %p118
        %p250 = pneg %p115
        %p251 = pneg %p144
        %p252 = pneg %p141
        %s253 = smul.u32 8, %s24
        %s254 = smul.u32 2, %s25
        %p255 = scmp.eq.s32.totalorder %s25, 0
        // Predicated region
        $region49: #{tpu_custom_call.1} parent=35 // pred_check
          %p256 = pneg %p255
        $region50: #{tpu_custom_call.1} parent=35 // pred_check_branch
          %258 = sbr.rel (%p256) target = $region52
        $region51: #{tpu_custom_call.1} parent=35 // pred_region
          %259 = vst [vmem:[#allocation2] sm:$0xff] 0.0
        $region52: #{tpu_custom_call.1} parent=35 // pred_fallthru
          _
        %v260 = vld [vmem:[%s225] sm:$0xff]
        %v261 = vld [vmem:[%s225 + $0x8] sm:$0xff]
        %v262 = vld [vmem:[%s225 + $0x10] sm:$0xff]
        %v263 = vld [vmem:[%s225 + $0x18] sm:$0xff]
        %v264 = vld [vmem:[%s225 + $0x20] sm:$0xff]
        %v265 = vld [vmem:[%s225 + $0x28] sm:$0xff]
        %v266 = vld [vmem:[%s225 + $0x30] sm:$0xff]
        %v267 = vld [vmem:[%s225 + $0x38] sm:$0xff]
        %v268 = vld [vmem:[%s225 + $0x40] sm:$0xff]
        %v269 = vld [vmem:[%s225 + $0x48] sm:$0xff]
        %v270 = vld [vmem:[%s225 + $0x50] sm:$0xff]
        %v271 = vld [vmem:[%s225 + $0x58] sm:$0xff]
        %v272 = vld [vmem:[%s225 + $0x60] sm:$0xff]
        %v273 = vld [vmem:[%s225 + $0x68] sm:$0xff]
        %v274 = vld [vmem:[%s225 + $0x70] sm:$0xff]
        %v275 = vld [vmem:[%s225 + $0x78] sm:$0xff]
        %v276 = vld [vmem:[%s225 + $0x80] sm:$0xff]
        %v277 = vld [vmem:[%s225 + $0x88] sm:$0xff]
        %v278 = vld [vmem:[%s225 + $0x90] sm:$0xff]
        %v279 = vld [vmem:[%s225 + $0x98] sm:$0xff]
        %v280 = vld [vmem:[%s225 + $0xa0] sm:$0xff]
        %v281 = vld [vmem:[%s225 + $0xa8] sm:$0xff]
        %v282 = vld [vmem:[%s225 + $0xb0] sm:$0xff]
        %v283 = vld [vmem:[%s225 + $0xb8] sm:$0xff]
        %v284 = vld [vmem:[%s225 + $0xc0] sm:$0xff]
        %v285 = vld [vmem:[%s225 + $0xc8] sm:$0xff]
        %v286 = vld [vmem:[%s225 + $0xd0] sm:$0xff]
        %v287 = vld [vmem:[%s225 + $0xd8] sm:$0xff]
        %v288 = vld [vmem:[%s225 + $0xe0] sm:$0xff]
        %v289 = vld [vmem:[%s225 + $0xe8] sm:$0xff]
        %v290 = vld [vmem:[%s225 + $0xf0] sm:$0xff]
        %v291 = vld [vmem:[%s225 + $0xf8] sm:$0xff]
        %v292 = vld [vmem:[%s225 + $0x100] sm:$0xff]
        %v293 = vld [vmem:[%s225 + $0x108] sm:$0xff]
        %v294 = vld [vmem:[%s225 + $0x110] sm:$0xff]
        %v295 = vld [vmem:[%s225 + $0x118] sm:$0xff]
        %v296 = vld [vmem:[%s225 + $0x120] sm:$0xff]
        %v297 = vld [vmem:[%s225 + $0x128] sm:$0xff]
        %v298 = vld [vmem:[%s225 + $0x130] sm:$0xff]
        %v299 = vld [vmem:[%s225 + $0x138] sm:$0xff]
        %v300 = vld [vmem:[%s225 + $0x140] sm:$0xff]
        %v301 = vld [vmem:[%s225 + $0x148] sm:$0xff]
        %v302 = vld [vmem:[%s225 + $0x150] sm:$0xff]
        %v303 = vld [vmem:[%s225 + $0x158] sm:$0xff]
        %v304 = vld [vmem:[%s225 + $0x160] sm:$0xff]
        %v305 = vld [vmem:[%s225 + $0x168] sm:$0xff]
        %v306 = vld [vmem:[%s225 + $0x170] sm:$0xff]
        %v307 = vld [vmem:[%s225 + $0x178] sm:$0xff]
        %v308 = vld [vmem:[%s225 + $0x180] sm:$0xff]
        %v309 = vld [vmem:[%s225 + $0x188] sm:$0xff]
        %v310 = vld [vmem:[%s225 + $0x190] sm:$0xff]
        %v311 = vld [vmem:[%s225 + $0x198] sm:$0xff]
        %v312 = vld [vmem:[%s225 + $0x1a0] sm:$0xff]
        %v313 = vld [vmem:[%s225 + $0x1a8] sm:$0xff]
        %v314 = vld [vmem:[%s225 + $0x1b0] sm:$0xff]
        %v315 = vld [vmem:[%s225 + $0x1b8] sm:$0xff]
        %v316 = vld [vmem:[%s225 + $0x1c0] sm:$0xff]
        %v317 = vld [vmem:[%s225 + $0x1c8] sm:$0xff]
        %v318 = vld [vmem:[%s225 + $0x1d0] sm:$0xff]
        %v319 = vld [vmem:[%s225 + $0x1d8] sm:$0xff]
        %v320 = vld [vmem:[%s225 + $0x1e0] sm:$0xff]
        %v321 = vld [vmem:[%s225 + $0x1e8] sm:$0xff]
        %v322 = vld [vmem:[%s225 + $0x1f0] sm:$0xff]
        %v323 = vld [vmem:[%s225 + $0x1f8] sm:$0xff]
        %v324 = vld [vmem:[%s225 + $0x200] sm:$0xff]
        %v325 = vld [vmem:[%s225 + $0x208] sm:$0xff]
        %v326 = vld [vmem:[%s225 + $0x210] sm:$0xff]
        %v327 = vld [vmem:[%s225 + $0x218] sm:$0xff]
        %v328 = vld [vmem:[%s225 + $0x220] sm:$0xff]
        %v329 = vld [vmem:[%s225 + $0x228] sm:$0xff]
        %v330 = vld [vmem:[%s225 + $0x230] sm:$0xff]
        %v331 = vld [vmem:[%s225 + $0x238] sm:$0xff]
        %v332 = vld [vmem:[%s225 + $0x240] sm:$0xff]
        %v333 = vld [vmem:[%s225 + $0x248] sm:$0xff]
        %v334 = vld [vmem:[%s225 + $0x250] sm:$0xff]
        %v335 = vld [vmem:[%s225 + $0x258] sm:$0xff]
        %v336 = vld [vmem:[%s225 + $0x260] sm:$0xff]
        %v337 = vld [vmem:[%s225 + $0x268] sm:$0xff]
        %v338 = vld [vmem:[%s225 + $0x270] sm:$0xff]
        %v339 = vld [vmem:[%s225 + $0x278] sm:$0xff]
        %v340 = vld [vmem:[%s225 + $0x280] sm:$0xff]
        %v341 = vld [vmem:[%s225 + $0x288] sm:$0xff]
        %v342 = vld [vmem:[%s225 + $0x290] sm:$0xff]
        %v343 = vld [vmem:[%s225 + $0x298] sm:$0xff]
        %v344 = vld [vmem:[%s225 + $0x2a0] sm:$0xff]
        %v345 = vld [vmem:[%s225 + $0x2a8] sm:$0xff]
        %v346 = vld [vmem:[%s225 + $0x2b0] sm:$0xff]
        %v347 = vld [vmem:[%s225 + $0x2b8] sm:$0xff]
        %v348 = vld [vmem:[%s225 + $0x2c0] sm:$0xff]
        %v349 = vld [vmem:[%s225 + $0x2c8] sm:$0xff]
        %v350 = vld [vmem:[%s225 + $0x2d0] sm:$0xff]
        %v351 = vld [vmem:[%s225 + $0x2d8] sm:$0xff]
        %v352 = vld [vmem:[%s225 + $0x2e0] sm:$0xff]
        %v353 = vld [vmem:[%s225 + $0x2e8] sm:$0xff]
        %v354 = vld [vmem:[%s225 + $0x2f0] sm:$0xff]
        %v355 = vld [vmem:[%s225 + $0x2f8] sm:$0xff]
        %v356 = vld [vmem:[%s225 + $0x300] sm:$0xff]
        %v357 = vld [vmem:[%s225 + $0x308] sm:$0xff]
        %v358 = vld [vmem:[%s225 + $0x310] sm:$0xff]
        %v359 = vld [vmem:[%s225 + $0x318] sm:$0xff]
        %v360 = vld [vmem:[%s225 + $0x320] sm:$0xff]
        %v361 = vld [vmem:[%s225 + $0x328] sm:$0xff]
        %v362 = vld [vmem:[%s225 + $0x330] sm:$0xff]
        %v363 = vld [vmem:[%s225 + $0x338] sm:$0xff]
        %v364 = vld [vmem:[%s225 + $0x340] sm:$0xff]
        %v365 = vld [vmem:[%s225 + $0x348] sm:$0xff]
        %v366 = vld [vmem:[%s225 + $0x350] sm:$0xff]
        %v367 = vld [vmem:[%s225 + $0x358] sm:$0xff]
        %v368 = vld [vmem:[%s225 + $0x360] sm:$0xff]
        %v369 = vld [vmem:[%s225 + $0x368] sm:$0xff]
        %v370 = vld [vmem:[%s225 + $0x370] sm:$0xff]
        %v371 = vld [vmem:[%s225 + $0x378] sm:$0xff]
        %v372 = vld [vmem:[%s225 + $0x380] sm:$0xff]
        %v373 = vld [vmem:[%s225 + $0x388] sm:$0xff]
        %v374 = vld [vmem:[%s225 + $0x390] sm:$0xff]
        %v375 = vld [vmem:[%s225 + $0x398] sm:$0xff]
        %v376 = vld [vmem:[%s225 + $0x3a0] sm:$0xff]
        %v377 = vld [vmem:[%s225 + $0x3a8] sm:$0xff]
        %v378 = vld [vmem:[%s225 + $0x3b0] sm:$0xff]
        %v379 = vld [vmem:[%s225 + $0x3b8] sm:$0xff]
        %v380 = vld [vmem:[%s225 + $0x3c0] sm:$0xff]
        %v381 = vld [vmem:[%s225 + $0x3c8] sm:$0xff]
        %v382 = vld [vmem:[%s225 + $0x3d0] sm:$0xff]
        %v383 = vld [vmem:[%s225 + $0x3d8] sm:$0xff]
        %v384 = vld [vmem:[%s225 + $0x3e0] sm:$0xff]
        %v385 = vld [vmem:[%s225 + $0x3e8] sm:$0xff]
        %v386 = vld [vmem:[%s225 + $0x3f0] sm:$0xff]
        %v387 = vld [vmem:[%s225 + $0x3f8] sm:$0xff]
        %v388 = vld [vmem:[%s225 + $0x400] sm:$0xff]
        %v389 = vld [vmem:[%s225 + $0x408] sm:$0xff]
        %v390 = vld [vmem:[%s225 + $0x410] sm:$0xff]
        %v391 = vld [vmem:[%s225 + $0x418] sm:$0xff]
        %v392 = vld [vmem:[%s225 + $0x420] sm:$0xff]
        %v393 = vld [vmem:[%s225 + $0x428] sm:$0xff]
        %v394 = vld [vmem:[%s225 + $0x430] sm:$0xff]
        %v395 = vld [vmem:[%s225 + $0x438] sm:$0xff]
        %v396 = vld [vmem:[%s225 + $0x440] sm:$0xff]
        %v397 = vld [vmem:[%s225 + $0x448] sm:$0xff]
        %v398 = vld [vmem:[%s225 + $0x450] sm:$0xff]
        %v399 = vld [vmem:[%s225 + $0x458] sm:$0xff]
        %v400 = vld [vmem:[%s225 + $0x460] sm:$0xff]
        %v401 = vld [vmem:[%s225 + $0x468] sm:$0xff]
        %v402 = vld [vmem:[%s225 + $0x470] sm:$0xff]
        %v403 = vld [vmem:[%s225 + $0x478] sm:$0xff]
        %v404 = vld [vmem:[%s225 + $0x480] sm:$0xff]
        %v405 = vld [vmem:[%s225 + $0x488] sm:$0xff]
        %v406 = vld [vmem:[%s225 + $0x490] sm:$0xff]
        %v407 = vld [vmem:[%s225 + $0x498] sm:$0xff]
        %v408 = vld [vmem:[%s225 + $0x4a0] sm:$0xff]
        %v409 = vld [vmem:[%s225 + $0x4a8] sm:$0xff]
        %v410 = vld [vmem:[%s225 + $0x4b0] sm:$0xff]
        %v411 = vld [vmem:[%s225 + $0x4b8] sm:$0xff]
        %v412 = vld [vmem:[%s225 + $0x4c0] sm:$0xff]
        %v413 = vld [vmem:[%s225 + $0x4c8] sm:$0xff]
        %v414 = vld [vmem:[%s225 + $0x4d0] sm:$0xff]
        %v415 = vld [vmem:[%s225 + $0x4d8] sm:$0xff]
        %v416 = vld [vmem:[%s225 + $0x4e0] sm:$0xff]
        %v417 = vld [vmem:[%s225 + $0x4e8] sm:$0xff]
        %v418 = vld [vmem:[%s225 + $0x4f0] sm:$0xff]
        %v419 = vld [vmem:[%s225 + $0x4f8] sm:$0xff]
        %v420 = vld [vmem:[%s225 + $0x500] sm:$0xff]
        %v421 = vld [vmem:[%s225 + $0x508] sm:$0xff]
        %v422 = vld [vmem:[%s225 + $0x510] sm:$0xff]
        %v423 = vld [vmem:[%s225 + $0x518] sm:$0xff]
        %v424 = vld [vmem:[%s225 + $0x520] sm:$0xff]
        %v425 = vld [vmem:[%s225 + $0x528] sm:$0xff]
        %v426 = vld [vmem:[%s225 + $0x530] sm:$0xff]
        %v427 = vld [vmem:[%s225 + $0x538] sm:$0xff]
        %v428 = vld [vmem:[%s225 + $0x540] sm:$0xff]
        %v429 = vld [vmem:[%s225 + $0x548] sm:$0xff]
        %v430 = vld [vmem:[%s225 + $0x550] sm:$0xff]
        %v431 = vld [vmem:[%s225 + $0x558] sm:$0xff]
        %v432 = vld [vmem:[%s225 + $0x560] sm:$0xff]
        %v433 = vld [vmem:[%s225 + $0x568] sm:$0xff]
        %v434 = vld [vmem:[%s225 + $0x570] sm:$0xff]
        %v435 = vld [vmem:[%s225 + $0x578] sm:$0xff]
        %v436 = vld [vmem:[%s225 + $0x580] sm:$0xff]
        %v437 = vld [vmem:[%s225 + $0x588] sm:$0xff]
        %v438 = vld [vmem:[%s225 + $0x590] sm:$0xff]
        %v439 = vld [vmem:[%s225 + $0x598] sm:$0xff]
        %v440 = vld [vmem:[%s225 + $0x5a0] sm:$0xff]
        %v441 = vld [vmem:[%s225 + $0x5a8] sm:$0xff]
        %v442 = vld [vmem:[%s225 + $0x5b0] sm:$0xff]
        %v443 = vld [vmem:[%s225 + $0x5b8] sm:$0xff]
        %v444 = vld [vmem:[%s225 + $0x5c0] sm:$0xff]
        %v445 = vld [vmem:[%s225 + $0x5c8] sm:$0xff]
        %v446 = vld [vmem:[%s225 + $0x5d0] sm:$0xff]
        %v447 = vld [vmem:[%s225 + $0x5d8] sm:$0xff]
        %v448 = vld [vmem:[%s225 + $0x5e0] sm:$0xff]
        %v449 = vld [vmem:[%s225 + $0x5e8] sm:$0xff]
        %v450 = vld [vmem:[%s225 + $0x5f0] sm:$0xff]
        %v451 = vld [vmem:[%s225 + $0x5f8] sm:$0xff]
        %v452 = vld [vmem:[%s225 + $0x600] sm:$0xff]
        %v453 = vld [vmem:[%s225 + $0x608] sm:$0xff]
        %v454 = vld [vmem:[%s225 + $0x610] sm:$0xff]
        %v455 = vld [vmem:[%s225 + $0x618] sm:$0xff]
        %v456 = vld [vmem:[%s225 + $0x620] sm:$0xff]
        %v457 = vld [vmem:[%s225 + $0x628] sm:$0xff]
        %v458 = vld [vmem:[%s225 + $0x630] sm:$0xff]
        %v459 = vld [vmem:[%s225 + $0x638] sm:$0xff]
        %v460 = vld [vmem:[%s225 + $0x640] sm:$0xff]
        %v461 = vld [vmem:[%s225 + $0x648] sm:$0xff]
        %v462 = vld [vmem:[%s225 + $0x650] sm:$0xff]
        %v463 = vld [vmem:[%s225 + $0x658] sm:$0xff]
        %v464 = vld [vmem:[%s225 + $0x660] sm:$0xff]
        %v465 = vld [vmem:[%s225 + $0x668] sm:$0xff]
        %v466 = vld [vmem:[%s225 + $0x670] sm:$0xff]
        %v467 = vld [vmem:[%s225 + $0x678] sm:$0xff]
        %v468 = vld [vmem:[%s225 + $0x680] sm:$0xff]
        %v469 = vld [vmem:[%s225 + $0x688] sm:$0xff]
        %v470 = vld [vmem:[%s225 + $0x690] sm:$0xff]
        %v471 = vld [vmem:[%s225 + $0x698] sm:$0xff]
        %v472 = vld [vmem:[%s225 + $0x6a0] sm:$0xff]
        %v473 = vld [vmem:[%s225 + $0x6a8] sm:$0xff]
        %v474 = vld [vmem:[%s225 + $0x6b0] sm:$0xff]
        %v475 = vld [vmem:[%s225 + $0x6b8] sm:$0xff]
        %v476 = vld [vmem:[%s225 + $0x6c0] sm:$0xff]
        %v477 = vld [vmem:[%s225 + $0x6c8] sm:$0xff]
        %v478 = vld [vmem:[%s225 + $0x6d0] sm:$0xff]
        %v479 = vld [vmem:[%s225 + $0x6d8] sm:$0xff]
        %v480 = vld [vmem:[%s225 + $0x6e0] sm:$0xff]
        %v481 = vld [vmem:[%s225 + $0x6e8] sm:$0xff]
        %v482 = vld [vmem:[%s225 + $0x6f0] sm:$0xff]
        %v483 = vld [vmem:[%s225 + $0x6f8] sm:$0xff]
        %v484 = vld [vmem:[%s225 + $0x700] sm:$0xff]
        %v485 = vld [vmem:[%s225 + $0x708] sm:$0xff]
        %v486 = vld [vmem:[%s225 + $0x710] sm:$0xff]
        %v487 = vld [vmem:[%s225 + $0x718] sm:$0xff]
        %v488 = vld [vmem:[%s225 + $0x720] sm:$0xff]
        %v489 = vld [vmem:[%s225 + $0x728] sm:$0xff]
        %v490 = vld [vmem:[%s225 + $0x730] sm:$0xff]
        %v491 = vld [vmem:[%s225 + $0x738] sm:$0xff]
        %v492 = vld [vmem:[%s225 + $0x740] sm:$0xff]
        %v493 = vld [vmem:[%s225 + $0x748] sm:$0xff]
        %v494 = vld [vmem:[%s225 + $0x750] sm:$0xff]
        %v495 = vld [vmem:[%s225 + $0x758] sm:$0xff]
        %v496 = vld [vmem:[%s225 + $0x760] sm:$0xff]
        %v497 = vld [vmem:[%s225 + $0x768] sm:$0xff]
        %v498 = vld [vmem:[%s225 + $0x770] sm:$0xff]
        %v499 = vld [vmem:[%s225 + $0x778] sm:$0xff]
        %v500 = vld [vmem:[%s225 + $0x780] sm:$0xff]
        %v501 = vld [vmem:[%s225 + $0x788] sm:$0xff]
        %v502 = vld [vmem:[%s225 + $0x790] sm:$0xff]
        %v503 = vld [vmem:[%s225 + $0x798] sm:$0xff]
        %v504 = vld [vmem:[%s225 + $0x7a0] sm:$0xff]
        %v505 = vld [vmem:[%s225 + $0x7a8] sm:$0xff]
        %v506 = vld [vmem:[%s225 + $0x7b0] sm:$0xff]
        %v507 = vld [vmem:[%s225 + $0x7b8] sm:$0xff]
        %v508 = vld [vmem:[%s225 + $0x7c0] sm:$0xff]
        %v509 = vld [vmem:[%s225 + $0x7c8] sm:$0xff]
        %v510 = vld [vmem:[%s225 + $0x7d0] sm:$0xff]
        %v511 = vld [vmem:[%s225 + $0x7d8] sm:$0xff]
        %v512 = vld [vmem:[%s225 + $0x7e0] sm:$0xff]
        %v513 = vld [vmem:[%s225 + $0x7e8] sm:$0xff]
        %v514 = vld [vmem:[%s225 + $0x7f0] sm:$0xff]
        %v515 = vld [vmem:[%s225 + $0x7f8] sm:$0xff]
        %v516 = vld [vmem:[#allocation2] sm:$0xff]
        %v517 = vadd.f32 %v260, %v261
        %518 = vadd.xlane.f32.xlu0 %v517
        %v519 = vpop.xlane.xlu0 %518
        %v520 = vadd.f32 %v262, %v263
        %521 = vadd.xlane.f32.xlu0 %v520
        %v522 = vpop.xlane.xlu0 %521
        %v523 = vadd.f32 %v264, %v265
        %524 = vadd.xlane.f32.xlu0 %v523
        %v525 = vpop.xlane.xlu0 %524
        %v526 = vadd.f32 %v266, %v267
        %527 = vadd.xlane.f32.xlu0 %v526
        %v528 = vpop.xlane.xlu0 %527
        %v529 = vadd.f32 %v268, %v269
        %530 = vadd.xlane.f32.xlu0 %v529
        %v531 = vpop.xlane.xlu0 %530
        %v532 = vadd.f32 %v270, %v271
        %533 = vadd.xlane.f32.xlu0 %v532
        %v534 = vpop.xlane.xlu0 %533
        %v535 = vadd.f32 %v272, %v273
        %536 = vadd.xlane.f32.xlu0 %v535
        %v537 = vpop.xlane.xlu0 %536
        %v538 = vadd.f32 %v274, %v275
        %539 = vadd.xlane.f32.xlu0 %v538
        %v540 = vpop.xlane.xlu0 %539
        %v541 = vadd.f32 %v276, %v277
        %542 = vadd.xlane.f32.xlu0 %v541
        %v543 = vpop.xlane.xlu0 %542
        %v544 = vadd.f32 %v278, %v279
        %545 = vadd.xlane.f32.xlu0 %v544
        %v546 = vpop.xlane.xlu0 %545
        %v547 = vadd.f32 %v280, %v281
        %548 = vadd.xlane.f32.xlu0 %v547
        %v549 = vpop.xlane.xlu0 %548
        %v550 = vadd.f32 %v282, %v283
        %551 = vadd.xlane.f32.xlu0 %v550
        %v552 = vpop.xlane.xlu0 %551
        %v553 = vadd.f32 %v284, %v285
        %554 = vadd.xlane.f32.xlu0 %v553
        %v555 = vpop.xlane.xlu0 %554
        %v556 = vadd.f32 %v286, %v287
        %557 = vadd.xlane.f32.xlu0 %v556
        %v558 = vpop.xlane.xlu0 %557
        %v559 = vadd.f32 %v288, %v289
        %560 = vadd.xlane.f32.xlu0 %v559
        %v561 = vpop.xlane.xlu0 %560
        %v562 = vadd.f32 %v290, %v291
        %563 = vadd.xlane.f32.xlu0 %v562
        %v564 = vpop.xlane.xlu0 %563
        %v565 = vadd.f32 %v292, %v293
        %566 = vadd.xlane.f32.xlu0 %v565
        %v567 = vpop.xlane.xlu0 %566
        %v568 = vadd.f32 %v294, %v295
        %569 = vadd.xlane.f32.xlu0 %v568
        %v570 = vpop.xlane.xlu0 %569
        %v571 = vadd.f32 %v296, %v297
        %572 = vadd.xlane.f32.xlu0 %v571
        %v573 = vpop.xlane.xlu0 %572
        %v574 = vadd.f32 %v298, %v299
        %575 = vadd.xlane.f32.xlu0 %v574
        %v576 = vpop.xlane.xlu0 %575
        %v577 = vadd.f32 %v300, %v301
        %578 = vadd.xlane.f32.xlu0 %v577
        %v579 = vpop.xlane.xlu0 %578
        %v580 = vadd.f32 %v302, %v303
        %581 = vadd.xlane.f32.xlu0 %v580
        %v582 = vpop.xlane.xlu0 %581
        %v583 = vadd.f32 %v304, %v305
        %584 = vadd.xlane.f32.xlu0 %v583
        %v585 = vpop.xlane.xlu0 %584
        %v586 = vadd.f32 %v306, %v307
        %587 = vadd.xlane.f32.xlu0 %v586
        %v588 = vpop.xlane.xlu0 %587
        %v589 = vadd.f32 %v308, %v309
        %590 = vadd.xlane.f32.xlu0 %v589
        %v591 = vpop.xlane.xlu0 %590
        %v592 = vadd.f32 %v310, %v311
        %593 = vadd.xlane.f32.xlu0 %v592
        %v594 = vpop.xlane.xlu0 %593
        %v595 = vadd.f32 %v312, %v313
        %596 = vadd.xlane.f32.xlu0 %v595
        %v597 = vpop.xlane.xlu0 %596
        %v598 = vadd.f32 %v314, %v315
        %599 = vadd.xlane.f32.xlu0 %v598
        %v600 = vpop.xlane.xlu0 %599
        %v601 = vadd.f32 %v316, %v317
        %602 = vadd.xlane.f32.xlu0 %v601
        %v603 = vpop.xlane.xlu0 %602
        %v604 = vadd.f32 %v318, %v319
        %605 = vadd.xlane.f32.xlu0 %v604
        %v606 = vpop.xlane.xlu0 %605
        %v607 = vadd.f32 %v320, %v321
        %608 = vadd.xlane.f32.xlu0 %v607
        %v609 = vpop.xlane.xlu0 %608
        %v610 = vadd.f32 %v322, %v323
        %611 = vadd.xlane.f32.xlu0 %v610
        %v612 = vpop.xlane.xlu0 %611
        %v613 = vadd.f32 %v324, %v325
        %614 = vadd.xlane.f32.xlu0 %v613
        %v615 = vpop.xlane.xlu0 %614
        %v616 = vadd.f32 %v326, %v327
        %617 = vadd.xlane.f32.xlu0 %v616
        %v618 = vpop.xlane.xlu0 %617
        %v619 = vadd.f32 %v328, %v329
        %620 = vadd.xlane.f32.xlu0 %v619
        %v621 = vpop.xlane.xlu0 %620
        %v622 = vadd.f32 %v330, %v331
        %623 = vadd.xlane.f32.xlu0 %v622
        %v624 = vpop.xlane.xlu0 %623
        %v625 = vadd.f32 %v332, %v333
        %626 = vadd.xlane.f32.xlu0 %v625
        %v627 = vpop.xlane.xlu0 %626
        %v628 = vadd.f32 %v334, %v335
        %629 = vadd.xlane.f32.xlu0 %v628
        %v630 = vpop.xlane.xlu0 %629
        %v631 = vadd.f32 %v336, %v337
        %632 = vadd.xlane.f32.xlu0 %v631
        %v633 = vpop.xlane.xlu0 %632
        %v634 = vadd.f32 %v338, %v339
        %635 = vadd.xlane.f32.xlu0 %v634
        %v636 = vpop.xlane.xlu0 %635
        %v637 = vadd.f32 %v340, %v341
        %638 = vadd.xlane.f32.xlu0 %v637
        %v639 = vpop.xlane.xlu0 %638
        %v640 = vadd.f32 %v342, %v343
        %641 = vadd.xlane.f32.xlu0 %v640
        %v642 = vpop.xlane.xlu0 %641
        %v643 = vadd.f32 %v344, %v345
        %644 = vadd.xlane.f32.xlu0 %v643
        %v645 = vpop.xlane.xlu0 %644
        %v646 = vadd.f32 %v346, %v347
        %647 = vadd.xlane.f32.xlu0 %v646
        %v648 = vpop.xlane.xlu0 %647
        %v649 = vadd.f32 %v348, %v349
        %650 = vadd.xlane.f32.xlu0 %v649
        %v651 = vpop.xlane.xlu0 %650
        %v652 = vadd.f32 %v350, %v351
        %653 = vadd.xlane.f32.xlu0 %v652
        %v654 = vpop.xlane.xlu0 %653
        %v655 = vadd.f32 %v352, %v353
        %656 = vadd.xlane.f32.xlu0 %v655
        %v657 = vpop.xlane.xlu0 %656
        %v658 = vadd.f32 %v354, %v355
        %659 = vadd.xlane.f32.xlu0 %v658
        %v660 = vpop.xlane.xlu0 %659
        %v661 = vadd.f32 %v356, %v357
        %662 = vadd.xlane.f32.xlu0 %v661
        %v663 = vpop.xlane.xlu0 %662
        %v664 = vadd.f32 %v358, %v359
        %665 = vadd.xlane.f32.xlu0 %v664
        %v666 = vpop.xlane.xlu0 %665
        %v667 = vadd.f32 %v360, %v361
        %668 = vadd.xlane.f32.xlu0 %v667
        %v669 = vpop.xlane.xlu0 %668
        %v670 = vadd.f32 %v362, %v363
        %671 = vadd.xlane.f32.xlu0 %v670
        %v672 = vpop.xlane.xlu0 %671
        %v673 = vadd.f32 %v364, %v365
        %674 = vadd.xlane.f32.xlu0 %v673
        %v675 = vpop.xlane.xlu0 %674
        %v676 = vadd.f32 %v366, %v367
        %677 = vadd.xlane.f32.xlu0 %v676
        %v678 = vpop.xlane.xlu0 %677
        %v679 = vadd.f32 %v368, %v369
        %680 = vadd.xlane.f32.xlu0 %v679
        %v681 = vpop.xlane.xlu0 %680
        %v682 = vadd.f32 %v370, %v371
        %683 = vadd.xlane.f32.xlu0 %v682
        %v684 = vpop.xlane.xlu0 %683
        %v685 = vadd.f32 %v372, %v373
        %686 = vadd.xlane.f32.xlu0 %v685
        %v687 = vpop.xlane.xlu0 %686
        %v688 = vadd.f32 %v374, %v375
        %689 = vadd.xlane.f32.xlu0 %v688
        %v690 = vpop.xlane.xlu0 %689
        %v691 = vadd.f32 %v376, %v377
        %692 = vadd.xlane.f32.xlu0 %v691
        %v693 = vpop.xlane.xlu0 %692
        %v694 = vadd.f32 %v378, %v379
        %695 = vadd.xlane.f32.xlu0 %v694
        %v696 = vpop.xlane.xlu0 %695
        %v697 = vadd.f32 %v380, %v381
        %698 = vadd.xlane.f32.xlu0 %v697
        %v699 = vpop.xlane.xlu0 %698
        %v700 = vadd.f32 %v382, %v383
        %701 = vadd.xlane.f32.xlu0 %v700
        %v702 = vpop.xlane.xlu0 %701
        %v703 = vadd.f32 %v384, %v385
        %704 = vadd.xlane.f32.xlu0 %v703
        %v705 = vpop.xlane.xlu0 %704
        %v706 = vadd.f32 %v386, %v387
        %707 = vadd.xlane.f32.xlu0 %v706
        %v708 = vpop.xlane.xlu0 %707
        %v709 = vadd.f32 %v388, %v389
        %710 = vadd.xlane.f32.xlu0 %v709
        %v711 = vpop.xlane.xlu0 %710
        %v712 = vadd.f32 %v390, %v391
        %713 = vadd.xlane.f32.xlu0 %v712
        %v714 = vpop.xlane.xlu0 %713
        %v715 = vadd.f32 %v392, %v393
        %716 = vadd.xlane.f32.xlu0 %v715
        %v717 = vpop.xlane.xlu0 %716
        %v718 = vadd.f32 %v394, %v395
        %719 = vadd.xlane.f32.xlu0 %v718
        %v720 = vpop.xlane.xlu0 %719
        %v721 = vadd.f32 %v396, %v397
        %722 = vadd.xlane.f32.xlu0 %v721
        %v723 = vpop.xlane.xlu0 %722
        %v724 = vadd.f32 %v398, %v399
        %725 = vadd.xlane.f32.xlu0 %v724
        %v726 = vpop.xlane.xlu0 %725
        %v727 = vadd.f32 %v400, %v401
        %728 = vadd.xlane.f32.xlu0 %v727
        %v729 = vpop.xlane.xlu0 %728
        %v730 = vadd.f32 %v402, %v403
        %731 = vadd.xlane.f32.xlu0 %v730
        %v732 = vpop.xlane.xlu0 %731
        %v733 = vadd.f32 %v404, %v405
        %734 = vadd.xlane.f32.xlu0 %v733
        %v735 = vpop.xlane.xlu0 %734
        %v736 = vadd.f32 %v406, %v407
        %737 = vadd.xlane.f32.xlu0 %v736
        %v738 = vpop.xlane.xlu0 %737
        %v739 = vadd.f32 %v408, %v409
        %740 = vadd.xlane.f32.xlu0 %v739
        %v741 = vpop.xlane.xlu0 %740
        %v742 = vadd.f32 %v410, %v411
        %743 = vadd.xlane.f32.xlu0 %v742
        %v744 = vpop.xlane.xlu0 %743
        %v745 = vadd.f32 %v412, %v413
        %746 = vadd.xlane.f32.xlu0 %v745
        %v747 = vpop.xlane.xlu0 %746
        %v748 = vadd.f32 %v414, %v415
        %749 = vadd.xlane.f32.xlu0 %v748
        %v750 = vpop.xlane.xlu0 %749
        %v751 = vadd.f32 %v416, %v417
        %752 = vadd.xlane.f32.xlu0 %v751
        %v753 = vpop.xlane.xlu0 %752
        %v754 = vadd.f32 %v418, %v419
        %755 = vadd.xlane.f32.xlu0 %v754
        %v756 = vpop.xlane.xlu0 %755
        %v757 = vadd.f32 %v420, %v421
        %758 = vadd.xlane.f32.xlu0 %v757
        %v759 = vpop.xlane.xlu0 %758
        %v760 = vadd.f32 %v422, %v423
        %761 = vadd.xlane.f32.xlu0 %v760
        %v762 = vpop.xlane.xlu0 %761
        %v763 = vadd.f32 %v424, %v425
        %764 = vadd.xlane.f32.xlu0 %v763
        %v765 = vpop.xlane.xlu0 %764
        %v766 = vadd.f32 %v426, %v427
        %767 = vadd.xlane.f32.xlu0 %v766
        %v768 = vpop.xlane.xlu0 %767
        %v769 = vadd.f32 %v428, %v429
        %770 = vadd.xlane.f32.xlu0 %v769
        %v771 = vpop.xlane.xlu0 %770
        %v772 = vadd.f32 %v430, %v431
        %773 = vadd.xlane.f32.xlu0 %v772
        %v774 = vpop.xlane.xlu0 %773
        %v775 = vadd.f32 %v432, %v433
        %776 = vadd.xlane.f32.xlu0 %v775
        %v777 = vpop.xlane.xlu0 %776
        %v778 = vadd.f32 %v434, %v435
        %779 = vadd.xlane.f32.xlu0 %v778
        %v780 = vpop.xlane.xlu0 %779
        %v781 = vadd.f32 %v436, %v437
        %782 = vadd.xlane.f32.xlu0 %v781
        %v783 = vpop.xlane.xlu0 %782
        %v784 = vadd.f32 %v438, %v439
        %785 = vadd.xlane.f32.xlu0 %v784
        %v786 = vpop.xlane.xlu0 %785
        %v787 = vadd.f32 %v440, %v441
        %788 = vadd.xlane.f32.xlu0 %v787
        %v789 = vpop.xlane.xlu0 %788
        %v790 = vadd.f32 %v442, %v443
        %791 = vadd.xlane.f32.xlu0 %v790
        %v792 = vpop.xlane.xlu0 %791
        %v793 = vadd.f32 %v444, %v445
        %794 = vadd.xlane.f32.xlu0 %v793
        %v795 = vpop.xlane.xlu0 %794
        %v796 = vadd.f32 %v446, %v447
        %797 = vadd.xlane.f32.xlu0 %v796
        %v798 = vpop.xlane.xlu0 %797
        %v799 = vadd.f32 %v448, %v449
        %800 = vadd.xlane.f32.xlu0 %v799
        %v801 = vpop.xlane.xlu0 %800
        %v802 = vadd.f32 %v450, %v451
        %803 = vadd.xlane.f32.xlu0 %v802
        %v804 = vpop.xlane.xlu0 %803
        %v805 = vadd.f32 %v452, %v453
        %806 = vadd.xlane.f32.xlu0 %v805
        %v807 = vpop.xlane.xlu0 %806
        %v808 = vadd.f32 %v454, %v455
        %809 = vadd.xlane.f32.xlu0 %v808
        %v810 = vpop.xlane.xlu0 %809
        %v811 = vadd.f32 %v456, %v457
        %812 = vadd.xlane.f32.xlu0 %v811
        %v813 = vpop.xlane.xlu0 %812
        %v814 = vadd.f32 %v458, %v459
        %815 = vadd.xlane.f32.xlu0 %v814
        %v816 = vpop.xlane.xlu0 %815
        %v817 = vadd.f32 %v460, %v461
        %818 = vadd.xlane.f32.xlu0 %v817
        %v819 = vpop.xlane.xlu0 %818
        %v820 = vadd.f32 %v462, %v463
        %821 = vadd.xlane.f32.xlu0 %v820
        %v822 = vpop.xlane.xlu0 %821
        %v823 = vadd.f32 %v464, %v465
        %824 = vadd.xlane.f32.xlu0 %v823
        %v825 = vpop.xlane.xlu0 %824
        %v826 = vadd.f32 %v466, %v467
        %827 = vadd.xlane.f32.xlu0 %v826
        %v828 = vpop.xlane.xlu0 %827
        %v829 = vadd.f32 %v468, %v469
        %830 = vadd.xlane.f32.xlu0 %v829
        %v831 = vpop.xlane.xlu0 %830
        %v832 = vadd.f32 %v470, %v471
        %833 = vadd.xlane.f32.xlu0 %v832
        %v834 = vpop.xlane.xlu0 %833
        %v835 = vadd.f32 %v472, %v473
        %836 = vadd.xlane.f32.xlu0 %v835
        %v837 = vpop.xlane.xlu0 %836
        %v838 = vadd.f32 %v474, %v475
        %839 = vadd.xlane.f32.xlu0 %v838
        %v840 = vpop.xlane.xlu0 %839
        %v841 = vadd.f32 %v476, %v477
        %842 = vadd.xlane.f32.xlu0 %v841
        %v843 = vpop.xlane.xlu0 %842
        %v844 = vadd.f32 %v478, %v479
        %845 = vadd.xlane.f32.xlu0 %v844
        %v846 = vpop.xlane.xlu0 %845
        %v847 = vadd.f32 %v480, %v481
        %848 = vadd.xlane.f32.xlu0 %v847
        %v849 = vpop.xlane.xlu0 %848
        %v850 = vadd.f32 %v482, %v483
        %851 = vadd.xlane.f32.xlu0 %v850
        %v852 = vpop.xlane.xlu0 %851
        %v853 = vadd.f32 %v484, %v485
        %854 = vadd.xlane.f32.xlu0 %v853
        %v855 = vpop.xlane.xlu0 %854
        %v856 = vadd.f32 %v486, %v487
        %857 = vadd.xlane.f32.xlu0 %v856
        %v858 = vpop.xlane.xlu0 %857
        %v859 = vadd.f32 %v488, %v489
        %860 = vadd.xlane.f32.xlu0 %v859
        %v861 = vpop.xlane.xlu0 %860
        %v862 = vadd.f32 %v490, %v491
        %863 = vadd.xlane.f32.xlu0 %v862
        %v864 = vpop.xlane.xlu0 %863
        %v865 = vadd.f32 %v492, %v493
        %866 = vadd.xlane.f32.xlu0 %v865
        %v867 = vpop.xlane.xlu0 %866
        %v868 = vadd.f32 %v494, %v495
        %869 = vadd.xlane.f32.xlu0 %v868
        %v870 = vpop.xlane.xlu0 %869
        %v871 = vadd.f32 %v496, %v497
        %872 = vadd.xlane.f32.xlu0 %v871
        %v873 = vpop.xlane.xlu0 %872
        %v874 = vadd.f32 %v498, %v499
        %875 = vadd.xlane.f32.xlu0 %v874
        %v876 = vpop.xlane.xlu0 %875
        %v877 = vadd.f32 %v500, %v501
        %878 = vadd.xlane.f32.xlu0 %v877
        %v879 = vpop.xlane.xlu0 %878
        %v880 = vadd.f32 %v502, %v503
        %881 = vadd.xlane.f32.xlu0 %v880
        %v882 = vpop.xlane.xlu0 %881
        %v883 = vadd.f32 %v504, %v505
        %884 = vadd.xlane.f32.xlu0 %v883
        %v885 = vpop.xlane.xlu0 %884
        %v886 = vadd.f32 %v506, %v507
        %887 = vadd.xlane.f32.xlu0 %v886
        %v888 = vpop.xlane.xlu0 %887
        %v889 = vadd.f32 %v508, %v509
        %890 = vadd.xlane.f32.xlu0 %v889
        %v891 = vpop.xlane.xlu0 %890
        %v892 = vadd.f32 %v510, %v511
        %893 = vadd.xlane.f32.xlu0 %v892
        %v894 = vpop.xlane.xlu0 %893
        %v895 = vadd.f32 %v512, %v513
        %896 = vadd.xlane.f32.xlu0 %v895
        %v897 = vpop.xlane.xlu0 %896
        %v898 = vadd.f32 %v514, %v515
        %899 = vadd.xlane.f32.xlu0 %v898
        %v900 = vpop.xlane.xlu0 %899
        %v1029 = vlaneseq
        %v1030 = vand.u32 %v1029, 127
        %v1031 = vlaneseq
        %v1032 = vshrl.u32 %v1031, 7
        %v1033 = vsub.s32 %v1030, %v1032
        %v1034 = vrot.slane %v519, %v1033
        %v1035 = vadd.s32 %v1030, 4294967288
        %v1036 = vlaneseq
        %v1037 = vshrl.u32 %v1036, 7
        %v1038 = vsub.s32 %v1035, %v1037
        %v1039 = vrot.slane %v522, %v1038
        %vm1040 = vcmask 130112
        %v1041 = vsel %vm1040, %v1039, %v1034
        %v1042 = vadd.s32 %v1030, 4294967280
        %v1043 = vlaneseq
        %v1044 = vshrl.u32 %v1043, 7
        %v1045 = vsub.s32 %v1042, %v1044
        %v1046 = vrot.slane %v525, %v1045
        %vm1047 = vcmask 195712
        %v1048 = vsel %vm1047, %v1046, %v1041
        %v1049 = vadd.s32 %v1030, 4294967272
        %v1050 = vlaneseq
        %v1051 = vshrl.u32 %v1050, 7
        %v1052 = vsub.s32 %v1049, %v1051
        %v1053 = vrot.slane %v528, %v1052
        %vm1054 = vcmask 261312
        %v1055 = vsel %vm1054, %v1053, %v1048
        %v1056 = vadd.s32 %v1030, 4294967264
        %v1057 = vlaneseq
        %v1058 = vshrl.u32 %v1057, 7
        %v1059 = vsub.s32 %v1056, %v1058
        %v1060 = vrot.slane %v531, %v1059
        %vm1061 = vcmask 326912
        %v1062 = vsel %vm1061, %v1060, %v1055
        %v1063 = vadd.s32 %v1030, 4294967256
        %v1064 = vlaneseq
        %v1065 = vshrl.u32 %v1064, 7
        %v1066 = vsub.s32 %v1063, %v1065
        %v1067 = vrot.slane %v534, %v1066
        %vm1068 = vcmask 392512
        %v1069 = vsel %vm1068, %v1067, %v1062
        %v1070 = vadd.s32 %v1030, 4294967248
        %v1071 = vlaneseq
        %v1072 = vshrl.u32 %v1071, 7
        %v1073 = vsub.s32 %v1070, %v1072
        %v1074 = vrot.slane %v537, %v1073
        %vm1075 = vcmask 458112
        %v1076 = vsel %vm1075, %v1074, %v1069
        %v1077 = vadd.s32 %v1030, 4294967240
        %v1078 = vlaneseq
        %v1079 = vshrl.u32 %v1078, 7
        %v1080 = vsub.s32 %v1077, %v1079
        %v1081 = vrot.slane %v540, %v1080
        %vm1082 = vcmask 523712
        %v1083 = vsel %vm1082, %v1081, %v1076
        %v1084 = vadd.s32 %v1030, 4294967232
        %v1085 = vlaneseq
        %v1086 = vshrl.u32 %v1085, 7
        %v1087 = vsub.s32 %v1084, %v1086
        %v1088 = vrot.slane %v543, %v1087
        %vm1089 = vcmask 589312
        %v1090 = vsel %vm1089, %v1088, %v1083
        %v1091 = vadd.s32 %v1030, 4294967224
        %v1092 = vlaneseq
        %v1093 = vshrl.u32 %v1092, 7
        %v1094 = vsub.s32 %v1091, %v1093
        %v1095 = vrot.slane %v546, %v1094
        %vm1096 = vcmask 654912
        %v1097 = vsel %vm1096, %v1095, %v1090
        %v1098 = vadd.s32 %v1030, 4294967216
        %v1099 = vlaneseq
        %v1100 = vshrl.u32 %v1099, 7
        %v1101 = vsub.s32 %v1098, %v1100
        %v1102 = vrot.slane %v549, %v1101
        %vm1103 = vcmask 720512
        %v1104 = vsel %vm1103, %v1102, %v1097
        %v1105 = vadd.s32 %v1030, 4294967208
        %v1106 = vlaneseq
        %v1107 = vshrl.u32 %v1106, 7
        %v1108 = vsub.s32 %v1105, %v1107
        %v1109 = vrot.slane %v552, %v1108
        %vm1110 = vcmask 786112
        %v1111 = vsel %vm1110, %v1109, %v1104
        %v1112 = vadd.s32 %v1030, 4294967200
        %v1113 = vlaneseq
        %v1114 = vshrl.u32 %v1113, 7
        %v1115 = vsub.s32 %v1112, %v1114
        %v1116 = vrot.slane %v555, %v1115
        %vm1117 = vcmask 851712
        %v1118 = vsel %vm1117, %v1116, %v1111
        %v1119 = vadd.s32 %v1030, 4294967192
        %v1120 = vlaneseq
        %v1121 = vshrl.u32 %v1120, 7
        %v1122 = vsub.s32 %v1119, %v1121
        %v1123 = vrot.slane %v558, %v1122
        %vm1124 = vcmask 917312
        %v1125 = vsel %vm1124, %v1123, %v1118
        %v1126 = vadd.s32 %v1030, 4294967184
        %v1127 = vlaneseq
        %v1128 = vshrl.u32 %v1127, 7
        %v1129 = vsub.s32 %v1126, %v1128
        %v1130 = vrot.slane %v561, %v1129
        %vm1131 = vcmask 982912
        %v1132 = vsel %vm1131, %v1130, %v1125
        %v1133 = vadd.s32 %v1030, 4294967176
        %v1134 = vlaneseq
        %v1135 = vshrl.u32 %v1134, 7
        %v1136 = vsub.s32 %v1133, %v1135
        %v1137 = vrot.slane %v564, %v1136
        %vm1138 = vcmask 1048512
        %v1139 = vsel %vm1138, %v1137, %v1132
        %v1140 = vlaneseq
        %v1141 = vshrl.u32 %v1140, 7
        %v1142 = vsub.s32 %v1030, %v1141
        %v1143 = vrot.slane %v567, %v1142
        %v1144 = vlaneseq
        %v1145 = vshrl.u32 %v1144, 7
        %v1146 = vsub.s32 %v1035, %v1145
        %v1147 = vrot.slane %v570, %v1146
        %v1148 = vsel %vm1040, %v1147, %v1143
        %v1149 = vlaneseq
        %v1150 = vshrl.u32 %v1149, 7
        %v1151 = vsub.s32 %v1042, %v1150
        %v1152 = vrot.slane %v573, %v1151
        %v1153 = vsel %vm1047, %v1152, %v1148
        %v1154 = vlaneseq
        %v1155 = vshrl.u32 %v1154, 7
        %v1156 = vsub.s32 %v1049, %v1155
        %v1157 = vrot.slane %v576, %v1156
        %v1158 = vsel %vm1054, %v1157, %v1153
        %v1159 = vlaneseq
        %v1160 = vshrl.u32 %v1159, 7
        %v1161 = vsub.s32 %v1056, %v1160
        %v1162 = vrot.slane %v579, %v1161
        %v1163 = vsel %vm1061, %v1162, %v1158
        %v1164 = vlaneseq
        %v1165 = vshrl.u32 %v1164, 7
        %v1166 = vsub.s32 %v1063, %v1165
        %v1167 = vrot.slane %v582, %v1166
        %v1168 = vsel %vm1068, %v1167, %v1163
        %v1169 = vlaneseq
        %v1170 = vshrl.u32 %v1169, 7
        %v1171 = vsub.s32 %v1070, %v1170
        %v1172 = vrot.slane %v585, %v1171
        %v1173 = vsel %vm1075, %v1172, %v1168
        %v1174 = vlaneseq
        %v1175 = vshrl.u32 %v1174, 7
        %v1176 = vsub.s32 %v1077, %v1175
        %v1177 = vrot.slane %v588, %v1176
        %v1178 = vsel %vm1082, %v1177, %v1173
        %v1179 = vlaneseq
        %v1180 = vshrl.u32 %v1179, 7
        %v1181 = vsub.s32 %v1084, %v1180
        %v1182 = vrot.slane %v591, %v1181
        %v1183 = vsel %vm1089, %v1182, %v1178
        %v1184 = vlaneseq
        %v1185 = vshrl.u32 %v1184, 7
        %v1186 = vsub.s32 %v1091, %v1185
        %v1187 = vrot.slane %v594, %v1186
        %v1188 = vsel %vm1096, %v1187, %v1183
        %v1189 = vlaneseq
        %v1190 = vshrl.u32 %v1189, 7
        %v1191 = vsub.s32 %v1098, %v1190
        %v1192 = vrot.slane %v597, %v1191
        %v1193 = vsel %vm1103, %v1192, %v1188
        %v1194 = vlaneseq
        %v1195 = vshrl.u32 %v1194, 7
        %v1196 = vsub.s32 %v1105, %v1195
        %v1197 = vrot.slane %v600, %v1196
        %v1198 = vsel %vm1110, %v1197, %v1193
        %v1199 = vlaneseq
        %v1200 = vshrl.u32 %v1199, 7
        %v1201 = vsub.s32 %v1112, %v1200
        %v1202 = vrot.slane %v603, %v1201
        %v1203 = vsel %vm1117, %v1202, %v1198
        %v1204 = vlaneseq
        %v1205 = vshrl.u32 %v1204, 7
        %v1206 = vsub.s32 %v1119, %v1205
        %v1207 = vrot.slane %v606, %v1206
        %v1208 = vsel %vm1124, %v1207, %v1203
        %v1209 = vlaneseq
        %v1210 = vshrl.u32 %v1209, 7
        %v1211 = vsub.s32 %v1126, %v1210
        %v1212 = vrot.slane %v609, %v1211
        %v1213 = vsel %vm1131, %v1212, %v1208
        %v1214 = vlaneseq
        %v1215 = vshrl.u32 %v1214, 7
        %v1216 = vsub.s32 %v1133, %v1215
        %v1217 = vrot.slane %v612, %v1216
        %v1218 = vsel %vm1138, %v1217, %v1213
        %v1219 = vlaneseq
        %v1220 = vshrl.u32 %v1219, 7
        %v1221 = vsub.s32 %v1030, %v1220
        %v1222 = vrot.slane %v615, %v1221
        %v1223 = vlaneseq
        %v1224 = vshrl.u32 %v1223, 7
        %v1225 = vsub.s32 %v1035, %v1224
        %v1226 = vrot.slane %v618, %v1225
        %v1227 = vsel %vm1040, %v1226, %v1222
        %v1228 = vlaneseq
        %v1229 = vshrl.u32 %v1228, 7
        %v1230 = vsub.s32 %v1042, %v1229
        %v1231 = vrot.slane %v621, %v1230
        %v1232 = vsel %vm1047, %v1231, %v1227
        %v1233 = vlaneseq
        %v1234 = vshrl.u32 %v1233, 7
        %v1235 = vsub.s32 %v1049, %v1234
        %v1236 = vrot.slane %v624, %v1235
        %v1237 = vsel %vm1054, %v1236, %v1232
        %v1238 = vlaneseq
        %v1239 = vshrl.u32 %v1238, 7
        %v1240 = vsub.s32 %v1056, %v1239
        %v1241 = vrot.slane %v627, %v1240
        %v1242 = vsel %vm1061, %v1241, %v1237
        %v1243 = vlaneseq
        %v1244 = vshrl.u32 %v1243, 7
        %v1245 = vsub.s32 %v1063, %v1244
        %v1246 = vrot.slane %v630, %v1245
        %v1247 = vsel %vm1068, %v1246, %v1242
        %v1248 = vlaneseq
        %v1249 = vshrl.u32 %v1248, 7
        %v1250 = vsub.s32 %v1070, %v1249
        %v1251 = vrot.slane %v633, %v1250
        %v1252 = vsel %vm1075, %v1251, %v1247
        %v1253 = vlaneseq
        %v1254 = vshrl.u32 %v1253, 7
        %v1255 = vsub.s32 %v1077, %v1254
        %v1256 = vrot.slane %v636, %v1255
        %v1257 = vsel %vm1082, %v1256, %v1252
        %v1258 = vlaneseq
        %v1259 = vshrl.u32 %v1258, 7
        %v1260 = vsub.s32 %v1084, %v1259
        %v1261 = vrot.slane %v639, %v1260
        %v1262 = vsel %vm1089, %v1261, %v1257
        %v1263 = vlaneseq
        %v1264 = vshrl.u32 %v1263, 7
        %v1265 = vsub.s32 %v1091, %v1264
        %v1266 = vrot.slane %v642, %v1265
        %v1267 = vsel %vm1096, %v1266, %v1262
        %v1268 = vlaneseq
        %v1269 = vshrl.u32 %v1268, 7
        %v1270 = vsub.s32 %v1098, %v1269
        %v1271 = vrot.slane %v645, %v1270
        %v1272 = vsel %vm1103, %v1271, %v1267
        %v1273 = vlaneseq
        %v1274 = vshrl.u32 %v1273, 7
        %v1275 = vsub.s32 %v1105, %v1274
        %v1276 = vrot.slane %v648, %v1275
        %v1277 = vsel %vm1110, %v1276, %v1272
        %v1278 = vlaneseq
        %v1279 = vshrl.u32 %v1278, 7
        %v1280 = vsub.s32 %v1112, %v1279
        %v1281 = vrot.slane %v651, %v1280
        %v1282 = vsel %vm1117, %v1281, %v1277
        %v1283 = vlaneseq
        %v1284 = vshrl.u32 %v1283, 7
        %v1285 = vsub.s32 %v1119, %v1284
        %v1286 = vrot.slane %v654, %v1285
        %v1287 = vsel %vm1124, %v1286, %v1282
        %v1288 = vlaneseq
        %v1289 = vshrl.u32 %v1288, 7
        %v1290 = vsub.s32 %v1126, %v1289
        %v1291 = vrot.slane %v657, %v1290
        %v1292 = vsel %vm1131, %v1291, %v1287
        %v1293 = vlaneseq
        %v1294 = vshrl.u32 %v1293, 7
        %v1295 = vsub.s32 %v1133, %v1294
        %v1296 = vrot.slane %v660, %v1295
        %v1297 = vsel %vm1138, %v1296, %v1292
        %v1298 = vlaneseq
        %v1299 = vshrl.u32 %v1298, 7
        %v1300 = vsub.s32 %v1030, %v1299
        %v1301 = vrot.slane %v663, %v1300
        %v1302 = vlaneseq
        %v1303 = vshrl.u32 %v1302, 7
        %v1304 = vsub.s32 %v1035, %v1303
        %v1305 = vrot.slane %v666, %v1304
        %v1306 = vsel %vm1040, %v1305, %v1301
        %v1307 = vlaneseq
        %v1308 = vshrl.u32 %v1307, 7
        %v1309 = vsub.s32 %v1042, %v1308
        %v1310 = vrot.slane %v669, %v1309
        %v1311 = vsel %vm1047, %v1310, %v1306
        %v1312 = vlaneseq
        %v1313 = vshrl.u32 %v1312, 7
        %v1314 = vsub.s32 %v1049, %v1313
        %v1315 = vrot.slane %v672, %v1314
        %v1316 = vsel %vm1054, %v1315, %v1311
        %v1317 = vlaneseq
        %v1318 = vshrl.u32 %v1317, 7
        %v1319 = vsub.s32 %v1056, %v1318
        %v1320 = vrot.slane %v675, %v1319
        %v1321 = vsel %vm1061, %v1320, %v1316
        %v1322 = vlaneseq
        %v1323 = vshrl.u32 %v1322, 7
        %v1324 = vsub.s32 %v1063, %v1323
        %v1325 = vrot.slane %v678, %v1324
        %v1326 = vsel %vm1068, %v1325, %v1321
        %v1327 = vlaneseq
        %v1328 = vshrl.u32 %v1327, 7
        %v1329 = vsub.s32 %v1070, %v1328
        %v1330 = vrot.slane %v681, %v1329
        %v1331 = vsel %vm1075, %v1330, %v1326
        %v1332 = vlaneseq
        %v1333 = vshrl.u32 %v1332, 7
        %v1334 = vsub.s32 %v1077, %v1333
        %v1335 = vrot.slane %v684, %v1334
        %v1336 = vsel %vm1082, %v1335, %v1331
        %v1337 = vlaneseq
        %v1338 = vshrl.u32 %v1337, 7
        %v1339 = vsub.s32 %v1084, %v1338
        %v1340 = vrot.slane %v687, %v1339
        %v1341 = vsel %vm1089, %v1340, %v1336
        %v1342 = vlaneseq
        %v1343 = vshrl.u32 %v1342, 7
        %v1344 = vsub.s32 %v1091, %v1343
        %v1345 = vrot.slane %v690, %v1344
        %v1346 = vsel %vm1096, %v1345, %v1341
        %v1347 = vlaneseq
        %v1348 = vshrl.u32 %v1347, 7
        %v1349 = vsub.s32 %v1098, %v1348
        %v1350 = vrot.slane %v693, %v1349
        %v1351 = vsel %vm1103, %v1350, %v1346
        %v1352 = vlaneseq
        %v1353 = vshrl.u32 %v1352, 7
        %v1354 = vsub.s32 %v1105, %v1353
        %v1355 = vrot.slane %v696, %v1354
        %v1356 = vsel %vm1110, %v1355, %v1351
        %v1357 = vlaneseq
        %v1358 = vshrl.u32 %v1357, 7
        %v1359 = vsub.s32 %v1112, %v1358
        %v1360 = vrot.slane %v699, %v1359
        %v1361 = vsel %vm1117, %v1360, %v1356
        %v1362 = vlaneseq
        %v1363 = vshrl.u32 %v1362, 7
        %v1364 = vsub.s32 %v1119, %v1363
        %v1365 = vrot.slane %v702, %v1364
        %v1366 = vsel %vm1124, %v1365, %v1361
        %v1367 = vlaneseq
        %v1368 = vshrl.u32 %v1367, 7
        %v1369 = vsub.s32 %v1126, %v1368
        %v1370 = vrot.slane %v705, %v1369
        %v1371 = vsel %vm1131, %v1370, %v1366
        %v1372 = vlaneseq
        %v1373 = vshrl.u32 %v1372, 7
        %v1374 = vsub.s32 %v1133, %v1373
        %v1375 = vrot.slane %v708, %v1374
        %v1376 = vsel %vm1138, %v1375, %v1371
        %v1377 = vlaneseq
        %v1378 = vshrl.u32 %v1377, 7
        %v1379 = vsub.s32 %v1030, %v1378
        %v1380 = vrot.slane %v711, %v1379
        %v1381 = vlaneseq
        %v1382 = vshrl.u32 %v1381, 7
        %v1383 = vsub.s32 %v1035, %v1382
        %v1384 = vrot.slane %v714, %v1383
        %v1385 = vsel %vm1040, %v1384, %v1380
        %v1386 = vlaneseq
        %v1387 = vshrl.u32 %v1386, 7
        %v1388 = vsub.s32 %v1042, %v1387
        %v1389 = vrot.slane %v717, %v1388
        %v1390 = vsel %vm1047, %v1389, %v1385
        %v1391 = vlaneseq
        %v1392 = vshrl.u32 %v1391, 7
        %v1393 = vsub.s32 %v1049, %v1392
        %v1394 = vrot.slane %v720, %v1393
        %v1395 = vsel %vm1054, %v1394, %v1390
        %v1396 = vlaneseq
        %v1397 = vshrl.u32 %v1396, 7
        %v1398 = vsub.s32 %v1056, %v1397
        %v1399 = vrot.slane %v723, %v1398
        %v1400 = vsel %vm1061, %v1399, %v1395
        %v1401 = vlaneseq
        %v1402 = vshrl.u32 %v1401, 7
        %v1403 = vsub.s32 %v1063, %v1402
        %v1404 = vrot.slane %v726, %v1403
        %v1405 = vsel %vm1068, %v1404, %v1400
        %v1406 = vlaneseq
        %v1407 = vshrl.u32 %v1406, 7
        %v1408 = vsub.s32 %v1070, %v1407
        %v1409 = vrot.slane %v729, %v1408
        %v1410 = vsel %vm1075, %v1409, %v1405
        %v1411 = vlaneseq
        %v1412 = vshrl.u32 %v1411, 7
        %v1413 = vsub.s32 %v1077, %v1412
        %v1414 = vrot.slane %v732, %v1413
        %v1415 = vsel %vm1082, %v1414, %v1410
        %v1416 = vlaneseq
        %v1417 = vshrl.u32 %v1416, 7
        %v1418 = vsub.s32 %v1084, %v1417
        %v1419 = vrot.slane %v735, %v1418
        %v1420 = vsel %vm1089, %v1419, %v1415
        %v1421 = vlaneseq
        %v1422 = vshrl.u32 %v1421, 7
        %v1423 = vsub.s32 %v1091, %v1422
        %v1424 = vrot.slane %v738, %v1423
        %v1425 = vsel %vm1096, %v1424, %v1420
        %v1426 = vlaneseq
        %v1427 = vshrl.u32 %v1426, 7
        %v1428 = vsub.s32 %v1098, %v1427
        %v1429 = vrot.slane %v741, %v1428
        %v1430 = vsel %vm1103, %v1429, %v1425
        %v1431 = vlaneseq
        %v1432 = vshrl.u32 %v1431, 7
        %v1433 = vsub.s32 %v1105, %v1432
        %v1434 = vrot.slane %v744, %v1433
        %v1435 = vsel %vm1110, %v1434, %v1430
        %v1436 = vlaneseq
        %v1437 = vshrl.u32 %v1436, 7
        %v1438 = vsub.s32 %v1112, %v1437
        %v1439 = vrot.slane %v747, %v1438
        %v1440 = vsel %vm1117, %v1439, %v1435
        %v1441 = vlaneseq
        %v1442 = vshrl.u32 %v1441, 7
        %v1443 = vsub.s32 %v1119, %v1442
        %v1444 = vrot.slane %v750, %v1443
        %v1445 = vsel %vm1124, %v1444, %v1440
        %v1446 = vlaneseq
        %v1447 = vshrl.u32 %v1446, 7
        %v1448 = vsub.s32 %v1126, %v1447
        %v1449 = vrot.slane %v753, %v1448
        %v1450 = vsel %vm1131, %v1449, %v1445
        %v1451 = vlaneseq
        %v1452 = vshrl.u32 %v1451, 7
        %v1453 = vsub.s32 %v1133, %v1452
        %v1454 = vrot.slane %v756, %v1453
        %v1455 = vsel %vm1138, %v1454, %v1450
        %v1456 = vlaneseq
        %v1457 = vshrl.u32 %v1456, 7
        %v1458 = vsub.s32 %v1030, %v1457
        %v1459 = vrot.slane %v759, %v1458
        %v1460 = vlaneseq
        %v1461 = vshrl.u32 %v1460, 7
        %v1462 = vsub.s32 %v1035, %v1461
        %v1463 = vrot.slane %v762, %v1462
        %v1464 = vsel %vm1040, %v1463, %v1459
        %v1465 = vlaneseq
        %v1466 = vshrl.u32 %v1465, 7
        %v1467 = vsub.s32 %v1042, %v1466
        %v1468 = vrot.slane %v765, %v1467
        %v1469 = vsel %vm1047, %v1468, %v1464
        %v1470 = vlaneseq
        %v1471 = vshrl.u32 %v1470, 7
        %v1472 = vsub.s32 %v1049, %v1471
        %v1473 = vrot.slane %v768, %v1472
        %v1474 = vsel %vm1054, %v1473, %v1469
        %v1475 = vlaneseq
        %v1476 = vshrl.u32 %v1475, 7
        %v1477 = vsub.s32 %v1056, %v1476
        %v1478 = vrot.slane %v771, %v1477
        %v1479 = vsel %vm1061, %v1478, %v1474
        %v1480 = vlaneseq
        %v1481 = vshrl.u32 %v1480, 7
        %v1482 = vsub.s32 %v1063, %v1481
        %v1483 = vrot.slane %v774, %v1482
        %v1484 = vsel %vm1068, %v1483, %v1479
        %v1485 = vlaneseq
        %v1486 = vshrl.u32 %v1485, 7
        %v1487 = vsub.s32 %v1070, %v1486
        %v1488 = vrot.slane %v777, %v1487
        %v1489 = vsel %vm1075, %v1488, %v1484
        %v1490 = vlaneseq
        %v1491 = vshrl.u32 %v1490, 7
        %v1492 = vsub.s32 %v1077, %v1491
        %v1493 = vrot.slane %v780, %v1492
        %v1494 = vsel %vm1082, %v1493, %v1489
        %v1495 = vlaneseq
        %v1496 = vshrl.u32 %v1495, 7
        %v1497 = vsub.s32 %v1084, %v1496
        %v1498 = vrot.slane %v783, %v1497
        %v1499 = vsel %vm1089, %v1498, %v1494
        %v1500 = vlaneseq
        %v1501 = vshrl.u32 %v1500, 7
        %v1502 = vsub.s32 %v1091, %v1501
        %v1503 = vrot.slane %v786, %v1502
        %v1504 = vsel %vm1096, %v1503, %v1499
        %v1505 = vlaneseq
        %v1506 = vshrl.u32 %v1505, 7
        %v1507 = vsub.s32 %v1098, %v1506
        %v1508 = vrot.slane %v789, %v1507
        %v1509 = vsel %vm1103, %v1508, %v1504
        %v1510 = vlaneseq
        %v1511 = vshrl.u32 %v1510, 7
        %v1512 = vsub.s32 %v1105, %v1511
        %v1513 = vrot.slane %v792, %v1512
        %v1514 = vsel %vm1110, %v1513, %v1509
        %v1515 = vlaneseq
        %v1516 = vshrl.u32 %v1515, 7
        %v1517 = vsub.s32 %v1112, %v1516
        %v1518 = vrot.slane %v795, %v1517
        %v1519 = vsel %vm1117, %v1518, %v1514
        %v1520 = vlaneseq
        %v1521 = vshrl.u32 %v1520, 7
        %v1522 = vsub.s32 %v1119, %v1521
        %v1523 = vrot.slane %v798, %v1522
        %v1524 = vsel %vm1124, %v1523, %v1519
        %v1525 = vlaneseq
        %v1526 = vshrl.u32 %v1525, 7
        %v1527 = vsub.s32 %v1126, %v1526
        %v1528 = vrot.slane %v801, %v1527
        %v1529 = vsel %vm1131, %v1528, %v1524
        %v1530 = vlaneseq
        %v1531 = vshrl.u32 %v1530, 7
        %v1532 = vsub.s32 %v1133, %v1531
        %v1533 = vrot.slane %v804, %v1532
        %v1534 = vsel %vm1138, %v1533, %v1529
        %v1535 = vlaneseq
        %v1536 = vshrl.u32 %v1535, 7
        %v1537 = vsub.s32 %v1030, %v1536
        %v1538 = vrot.slane %v807, %v1537
        %v1539 = vlaneseq
        %v1540 = vshrl.u32 %v1539, 7
        %v1541 = vsub.s32 %v1035, %v1540
        %v1542 = vrot.slane %v810, %v1541
        %v1543 = vsel %vm1040, %v1542, %v1538
        %v1544 = vlaneseq
        %v1545 = vshrl.u32 %v1544, 7
        %v1546 = vsub.s32 %v1042, %v1545
        %v1547 = vrot.slane %v813, %v1546
        %v1548 = vsel %vm1047, %v1547, %v1543
        %v1549 = vlaneseq
        %v1550 = vshrl.u32 %v1549, 7
        %v1551 = vsub.s32 %v1049, %v1550
        %v1552 = vrot.slane %v816, %v1551
        %v1553 = vsel %vm1054, %v1552, %v1548
        %v1554 = vlaneseq
        %v1555 = vshrl.u32 %v1554, 7
        %v1556 = vsub.s32 %v1056, %v1555
        %v1557 = vrot.slane %v819, %v1556
        %v1558 = vsel %vm1061, %v1557, %v1553
        %v1559 = vlaneseq
        %v1560 = vshrl.u32 %v1559, 7
        %v1561 = vsub.s32 %v1063, %v1560
        %v1562 = vrot.slane %v822, %v1561
        %v1563 = vsel %vm1068, %v1562, %v1558
        %v1564 = vlaneseq
        %v1565 = vshrl.u32 %v1564, 7
        %v1566 = vsub.s32 %v1070, %v1565
        %v1567 = vrot.slane %v825, %v1566
        %v1568 = vsel %vm1075, %v1567, %v1563
        %v1569 = vlaneseq
        %v1570 = vshrl.u32 %v1569, 7
        %v1571 = vsub.s32 %v1077, %v1570
        %v1572 = vrot.slane %v828, %v1571
        %v1573 = vsel %vm1082, %v1572, %v1568
        %v1574 = vlaneseq
        %v1575 = vshrl.u32 %v1574, 7
        %v1576 = vsub.s32 %v1084, %v1575
        %v1577 = vrot.slane %v831, %v1576
        %v1578 = vsel %vm1089, %v1577, %v1573
        %v1579 = vlaneseq
        %v1580 = vshrl.u32 %v1579, 7
        %v1581 = vsub.s32 %v1091, %v1580
        %v1582 = vrot.slane %v834, %v1581
        %v1583 = vsel %vm1096, %v1582, %v1578
        %v1584 = vlaneseq
        %v1585 = vshrl.u32 %v1584, 7
        %v1586 = vsub.s32 %v1098, %v1585
        %v1587 = vrot.slane %v837, %v1586
        %v1588 = vsel %vm1103, %v1587, %v1583
        %v1589 = vlaneseq
        %v1590 = vshrl.u32 %v1589, 7
        %v1591 = vsub.s32 %v1105, %v1590
        %v1592 = vrot.slane %v840, %v1591
        %v1593 = vsel %vm1110, %v1592, %v1588
        %v1594 = vlaneseq
        %v1595 = vshrl.u32 %v1594, 7
        %v1596 = vsub.s32 %v1112, %v1595
        %v1597 = vrot.slane %v843, %v1596
        %v1598 = vsel %vm1117, %v1597, %v1593
        %v1599 = vlaneseq
        %v1600 = vshrl.u32 %v1599, 7
        %v1601 = vsub.s32 %v1119, %v1600
        %v1602 = vrot.slane %v846, %v1601
        %v1603 = vsel %vm1124, %v1602, %v1598
        %v1604 = vlaneseq
        %v1605 = vshrl.u32 %v1604, 7
        %v1606 = vsub.s32 %v1126, %v1605
        %v1607 = vrot.slane %v849, %v1606
        %v1608 = vsel %vm1131, %v1607, %v1603
        %v1609 = vlaneseq
        %v1610 = vshrl.u32 %v1609, 7
        %v1611 = vsub.s32 %v1133, %v1610
        %v1612 = vrot.slane %v852, %v1611
        %v1613 = vsel %vm1138, %v1612, %v1608
        %v1614 = vlaneseq
        %v1615 = vshrl.u32 %v1614, 7
        %v1616 = vsub.s32 %v1030, %v1615
        %v1617 = vrot.slane %v855, %v1616
        %v1618 = vlaneseq
        %v1619 = vshrl.u32 %v1618, 7
        %v1620 = vsub.s32 %v1035, %v1619
        %v1621 = vrot.slane %v858, %v1620
        %v1622 = vsel %vm1040, %v1621, %v1617
        %v1623 = vlaneseq
        %v1624 = vshrl.u32 %v1623, 7
        %v1625 = vsub.s32 %v1042, %v1624
        %v1626 = vrot.slane %v861, %v1625
        %v1627 = vsel %vm1047, %v1626, %v1622
        %v1628 = vlaneseq
        %v1629 = vshrl.u32 %v1628, 7
        %v1630 = vsub.s32 %v1049, %v1629
        %v1631 = vrot.slane %v864, %v1630
        %v1632 = vsel %vm1054, %v1631, %v1627
        %v1633 = vlaneseq
        %v1634 = vshrl.u32 %v1633, 7
        %v1635 = vsub.s32 %v1056, %v1634
        %v1636 = vrot.slane %v867, %v1635
        %v1637 = vsel %vm1061, %v1636, %v1632
        %v1638 = vlaneseq
        %v1639 = vshrl.u32 %v1638, 7
        %v1640 = vsub.s32 %v1063, %v1639
        %v1641 = vrot.slane %v870, %v1640
        %v1642 = vsel %vm1068, %v1641, %v1637
        %v1643 = vlaneseq
        %v1644 = vshrl.u32 %v1643, 7
        %v1645 = vsub.s32 %v1070, %v1644
        %v1646 = vrot.slane %v873, %v1645
        %v1647 = vsel %vm1075, %v1646, %v1642
        %v1648 = vlaneseq
        %v1649 = vshrl.u32 %v1648, 7
        %v1650 = vsub.s32 %v1077, %v1649
        %v1651 = vrot.slane %v876, %v1650
        %v1652 = vsel %vm1082, %v1651, %v1647
        %v1653 = vlaneseq
        %v1654 = vshrl.u32 %v1653, 7
        %v1655 = vsub.s32 %v1084, %v1654
        %v1656 = vrot.slane %v879, %v1655
        %v1657 = vsel %vm1089, %v1656, %v1652
        %v1658 = vlaneseq
        %v1659 = vshrl.u32 %v1658, 7
        %v1660 = vsub.s32 %v1091, %v1659
        %v1661 = vrot.slane %v882, %v1660
        %v1662 = vsel %vm1096, %v1661, %v1657
        %v1663 = vlaneseq
        %v1664 = vshrl.u32 %v1663, 7
        %v1665 = vsub.s32 %v1098, %v1664
        %v1666 = vrot.slane %v885, %v1665
        %v1667 = vsel %vm1103, %v1666, %v1662
        %v1668 = vlaneseq
        %v1669 = vshrl.u32 %v1668, 7
        %v1670 = vsub.s32 %v1105, %v1669
        %v1671 = vrot.slane %v888, %v1670
        %v1672 = vsel %vm1110, %v1671, %v1667
        %v1673 = vlaneseq
        %v1674 = vshrl.u32 %v1673, 7
        %v1675 = vsub.s32 %v1112, %v1674
        %v1676 = vrot.slane %v891, %v1675
        %v1677 = vsel %vm1117, %v1676, %v1672
        %v1678 = vlaneseq
        %v1679 = vshrl.u32 %v1678, 7
        %v1680 = vsub.s32 %v1119, %v1679
        %v1681 = vrot.slane %v894, %v1680
        %v1682 = vsel %vm1124, %v1681, %v1677
        %v1683 = vlaneseq
        %v1684 = vshrl.u32 %v1683, 7
        %v1685 = vsub.s32 %v1126, %v1684
        %v1686 = vrot.slane %v897, %v1685
        %v1687 = vsel %vm1131, %v1686, %v1682
        %v1688 = vlaneseq
        %v1689 = vshrl.u32 %v1688, 7
        %v1690 = vsub.s32 %v1133, %v1689
        %v1691 = vrot.slane %v900, %v1690
        %v1692 = vsel %vm1138, %v1691, %v1687
        %vm1693 = vcmask 1041409
        %v1694 = vsel %vm1693, %v1218, %v1139
        %vm1695 = vcmask 1042434
        %v1696 = vsel %vm1695, %v1297, %v1694
        %vm1697 = vcmask 1043459
        %v1698 = vsel %vm1697, %v1376, %v1696
        %vm1699 = vcmask 1044484
        %v1700 = vsel %vm1699, %v1455, %v1698
        %vm1701 = vcmask 1045509
        %v1702 = vsel %vm1701, %v1534, %v1700
        %vm1703 = vcmask 1046534
        %v1704 = vsel %vm1703, %v1613, %v1702
        %vm1705 = vcmask 1047559
        %v1706 = vsel %vm1705, %v1692, %v1704
        %v1708 = vadd.f32 %v516, %v1706
        %1709 = vst [vmem:[#allocation2] sm:$0xff] %v1708
        %p1710 = scmp.eq.s32.totalorder %s25, 3
        // Predicated region
        $region53: #{tpu_custom_call.1} parent=35 // pred_check
          %p1711 = pneg %p1710
        $region54: #{tpu_custom_call.1} parent=35 // pred_check_branch
          %1713 = sbr.rel (%p1711) target = $region56
        $region55: #{tpu_custom_call.1} parent=35 // pred_region
          %v1714 = vld [vmem:[#allocation2] sm:$0xff]
          %v1715 = vmul.f32 %v1714, 0.0009765625
          %v1716 = vld [vmem:[%s1] sm:$0xff]
          %v1717 = vld [vmem:[%s1 + $0x8] sm:$0xff]
          %v1718 = vld [vmem:[%s1 + $0x10] sm:$0xff]
          %v1719 = vld [vmem:[%s1 + $0x18] sm:$0xff]
          %v1720 = vld [vmem:[%s1 + $0x20] sm:$0xff]
          %v1721 = vld [vmem:[%s1 + $0x28] sm:$0xff]
          %v1722 = vld [vmem:[%s1 + $0x30] sm:$0xff]
          %v1723 = vld [vmem:[%s1 + $0x38] sm:$0xff]
          %v1724 = vld [vmem:[%s1 + $0x40] sm:$0xff]
          %v1725 = vld [vmem:[%s1 + $0x48] sm:$0xff]
          %v1726 = vld [vmem:[%s1 + $0x50] sm:$0xff]
          %v1727 = vld [vmem:[%s1 + $0x58] sm:$0xff]
          %v1728 = vld [vmem:[%s1 + $0x60] sm:$0xff]
          %v1729 = vld [vmem:[%s1 + $0x68] sm:$0xff]
          %v1730 = vld [vmem:[%s1 + $0x70] sm:$0xff]
          %v1731 = vld [vmem:[%s1 + $0x78] sm:$0xff]
          %v1732 = vld [vmem:[#allocation6] sm:$0xff]
          %v1733 = vld [vmem:[#allocation6 + $0x8] sm:$0xff]
          %v1734 = vld [vmem:[#allocation6 + $0x10] sm:$0xff]
          %v1735 = vld [vmem:[#allocation6 + $0x18] sm:$0xff]
          %v1736 = vld [vmem:[#allocation6 + $0x20] sm:$0xff]
          %v1737 = vld [vmem:[#allocation6 + $0x28] sm:$0xff]
          %v1738 = vld [vmem:[#allocation6 + $0x30] sm:$0xff]
          %v1739 = vld [vmem:[#allocation6 + $0x38] sm:$0xff]
          %v1740 = vld [vmem:[#allocation8] sm:$0x1]
          %1741 = vmatprep.subr.mxu0 0.0
          %1742 = vmatpush1.msra.mxu0 %v1731
          %1743 = vmatprep.subr.mxu0 0.0
          %1744 = vmatpush1.msra.mxu0 %v1730
          %1745 = vmatprep.subr.mxu0 0.0
          %1746 = vmatpush1.msra.mxu0 %v1729
          %1747 = vmatprep.subr.mxu0 0.0
          %1748 = vmatpush1.msra.mxu0 %v1728
          %1749 = vmatprep.subr.mxu0 0.0
          %1750 = vmatpush1.msra.mxu0 %v1727
          %1751 = vmatprep.subr.mxu0 0.0
          %1752 = vmatpush1.msra.mxu0 %v1726
          %1753 = vmatprep.subr.mxu0 0.0
          %1754 = vmatpush1.msra.mxu0 %v1725
          %1755 = vmatprep.subr.mxu0 0.0
          %1756 = vmatpush1.msra.mxu0 %v1724
          %1757 = vmatprep.subr.mxu0 0.0
          %1758 = vmatpush1.msra.mxu0 %v1723
          %1759 = vmatprep.subr.mxu0 0.0
          %1760 = vmatpush1.msra.mxu0 %v1722
          %1761 = vmatprep.subr.mxu0 0.0
          %1762 = vmatpush1.msra.mxu0 %v1721
          %1763 = vmatprep.subr.mxu0 0.0
          %1764 = vmatpush1.msra.mxu0 %v1720
          %1765 = vmatprep.subr.mxu0 0.0
          %1766 = vmatpush1.msra.mxu0 %v1719
          %1767 = vmatprep.subr.mxu0 0.0
          %1768 = vmatpush1.msra.mxu0 %v1718
          %1769 = vmatprep.subr.mxu0 0.0
          %1770 = vmatpush1.msra.mxu0 %v1717
          %1771 = vmatprep.subr.mxu0 0.0
          %1772 = vmatpush1.msra.mxu0 %v1716
          %1773 = vmatprep.subr.mxu0 0.0
          %1774 = vmatpush2.msra.mxu0 0.0
          %1775 = vmatprep.subr.mxu0 0.0
          %1776 = vmatpush2.msra.mxu0 0.0
          %1777 = vmatprep.subr.mxu0 0.0
          %1778 = vmatpush2.msra.mxu0 0.0
          %1779 = vmatprep.subr.mxu0 0.0
          %1780 = vmatpush2.msra.mxu0 0.0
          %1781 = vmatprep.subr.mxu0 0.0
          %1782 = vmatpush2.msra.mxu0 0.0
          %1783 = vmatprep.subr.mxu0 0.0
          %1784 = vmatpush2.msra.mxu0 0.0
          %1785 = vmatprep.subr.mxu0 0.0
          %1786 = vmatpush2.msra.mxu0 0.0
          %1787 = vmatprep.subr.mxu0 0.0
          %1788 = vmatpush2.msra.mxu0 0.0
          %1789 = vmatprep.subr.mxu0 0.0
          %1790 = vmatpush2.msra.mxu0 0.0
          %1791 = vmatprep.subr.mxu0 0.0
          %1792 = vmatpush2.msra.mxu0 0.0
          %1793 = vmatprep.subr.mxu0 0.0
          %1794 = vmatpush2.msra.mxu0 0.0
          %1795 = vmatprep.subr.mxu0 0.0
          %1796 = vmatpush2.msra.mxu0 0.0
          %1797 = vmatprep.subr.mxu0 0.0
          %1798 = vmatpush2.msra.mxu0 0.0
          %1799 = vmatprep.subr.mxu0 0.0
          %1800 = vmatpush2.msra.mxu0 0.0
          %1801 = vmatprep.subr.mxu0 0.0
          %1802 = vmatpush2.msra.mxu0 0.0
          %1803 = vmatprep.subr.mxu0 0.0
          %1804 = vmatpush2.msra.mxu0 0.0
          %1805 = vmatprep.mubr.f32.mxu0 0.0
          %1806 = vmatmul.mubr.f32.gmra.mxu0 %v1715
          %v1807 = vpop.f32.mrf.mxu0
          %v1808 = vadd.f32 0.0, %v1807
          %v1809 = vpop.f32.mrf.mxu0
          %1810 = vdwg.mxu0
          %v1811 = vmax.f32 %v1808, 0.0
          %v1813 = vlaneseq
          %v1814 = vshrl.u32 %v1813, 7
          %v1815 = vsub.s32 0, %v1814
          %v1816 = vrot.slane %v1740, %v1815
          %vm1818 = vcmask 523264
          %v1820 = vsel %vm1818, %v1811, 0
          %1822 = vmatprep.subr.mxu0 0.0
          %1823 = vmatpush1.msra.mxu0 0.0
          %1824 = vmatprep.subr.mxu0 0.0
          %1825 = vmatpush1.msra.mxu0 0.0
          %1826 = vmatprep.subr.mxu0 0.0
          %1827 = vmatpush1.msra.mxu0 0.0
          %1828 = vmatprep.subr.mxu0 0.0
          %1829 = vmatpush1.msra.mxu0 0.0
          %1830 = vmatprep.subr.mxu0 0.0
          %1831 = vmatpush1.msra.mxu0 0.0
          %1832 = vmatprep.subr.mxu0 0.0
          %1833 = vmatpush1.msra.mxu0 0.0
          %1834 = vmatprep.subr.mxu0 0.0
          %1835 = vmatpush1.msra.mxu0 0.0
          %1836 = vmatprep.subr.mxu0 0.0
          %1837 = vmatpush1.msra.mxu0 0.0
          %1838 = vmatprep.subr.mxu0 0.0
          %1839 = vmatpush1.msra.mxu0 %v1739
          %1840 = vmatprep.subr.mxu0 0.0
          %1841 = vmatpush1.msra.mxu0 %v1738
          %1842 = vmatprep.subr.mxu0 0.0
          %1843 = vmatpush1.msra.mxu0 %v1737
          %1844 = vmatprep.subr.mxu0 0.0
          %1845 = vmatpush1.msra.mxu0 %v1736
          %1846 = vmatprep.subr.mxu0 0.0
          %1847 = vmatpush1.msra.mxu0 %v1735
          %1848 = vmatprep.subr.mxu0 0.0
          %1849 = vmatpush1.msra.mxu0 %v1734
          %1850 = vmatprep.subr.mxu0 0.0
          %1851 = vmatpush1.msra.mxu0 %v1733
          %1852 = vmatprep.subr.mxu0 0.0
          %1853 = vmatpush1.msra.mxu0 %v1732
          %1854 = vmatprep.subr.mxu0 0.0
          %1855 = vmatpush2.msra.mxu0 0.0
          %1856 = vmatprep.subr.mxu0 0.0
          %1857 = vmatpush2.msra.mxu0 0.0
          %1858 = vmatprep.subr.mxu0 0.0
          %1859 = vmatpush2.msra.mxu0 0.0
          %1860 = vmatprep.subr.mxu0 0.0
          %1861 = vmatpush2.msra.mxu0 0.0
          %1862 = vmatprep.subr.mxu0 0.0
          %1863 = vmatpush2.msra.mxu0 0.0
          %1864 = vmatprep.subr.mxu0 0.0
          %1865 = vmatpush2.msra.mxu0 0.0
          %1866 = vmatprep.subr.mxu0 0.0
          %1867 = vmatpush2.msra.mxu0 0.0
          %1868 = vmatprep.subr.mxu0 0.0
          %1869 = vmatpush2.msra.mxu0 0.0
          %1870 = vmatprep.subr.mxu0 0.0
          %1871 = vmatpush2.msra.mxu0 0.0
          %1872 = vmatprep.subr.mxu0 0.0
          %1873 = vmatpush2.msra.mxu0 0.0
          %1874 = vmatprep.subr.mxu0 0.0
          %1875 = vmatpush2.msra.mxu0 0.0
          %1876 = vmatprep.subr.mxu0 0.0
          %1877 = vmatpush2.msra.mxu0 0.0
          %1878 = vmatprep.subr.mxu0 0.0
          %1879 = vmatpush2.msra.mxu0 0.0
          %1880 = vmatprep.subr.mxu0 0.0
          %1881 = vmatpush2.msra.mxu0 0.0
          %1882 = vmatprep.subr.mxu0 0.0
          %1883 = vmatpush2.msra.mxu0 0.0
          %1884 = vmatprep.subr.mxu0 0.0
          %1885 = vmatpush2.msra.mxu0 0.0
          %1886 = vmatprep.mubr.f32.mxu0 0.0
          %1887 = vmatmul.mubr.f32.gmra.mxu0 %v1820
          %v1888 = vpop.f32.mrf.mxu0
          %v1889 = vadd.f32 %v1816, %v1888
          %v1890 = vpop.f32.mrf.mxu0
          %1891 = vdwg.mxu0
          %v1892 = vxor.u32 %v1889, 2147483648
          %v1893 = vmul.f32 %v1892, 1.442695
          %v1894 = vpow.pop %v1893
          %v1895 = vadd.f32 %v1894, 1.0
          %v1896 = vrcp.pop %v1895
          %v1897 = vmul.f32 1.0, %v1896
          %1898 = vst [vmem:[#allocation9] sm:$0xff] %v1897
        $region56: #{tpu_custom_call.1} parent=35 // pred_fallthru
          _
        // Predicated region
        $region57: #{tpu_custom_call.1} parent=35 // pred_check
          %p1899 = pneg %p141
        $region58: #{tpu_custom_call.1} parent=35 // pred_check_branch
          %1901 = sbr.rel (%p1899) target = $region60
        $region59: #{tpu_custom_call.1} parent=35 // pred_region
          %s1903 = ssub.s32 128, 128
          %1904 = vsyncadd [#allocation5], %s1903
          %s1905 = smul.addr %s24, 128
          %s1906 = scalar_lea.hbm %s4, %s1905
          %s1908 = sshll.u32 [#allocation9], 4
          %s1909 = int_to_ptr.vmem [resolvable:$true] %s1908
          %1911 = dma.vmem_to_hbm [thread:$0]  %s1909, 128, %s1906, [#allocation5]
        $region60: #{tpu_custom_call.1} parent=35 // pred_fallthru
          _
        // Predicated region
        $region61: #{tpu_custom_call.1} parent=35 // pred_check
          %p1912 = pneg %p141
        $region62: #{tpu_custom_call.1} parent=35 // pred_check_branch
          %1914 = sbr.rel (%p1912) target = $region64
        $region63: #{tpu_custom_call.1} parent=35 // pred_region
          %1915 = dma.done [#allocation5], 128
        $region64: #{tpu_custom_call.1} parent=35 // pred_fallthru
          _
      $region36: #{tpu_custom_call.1} parent=5 // pred_fallthru
        _
      %p1916 = scmp.le.s32.totalorder 2, %s15
      // Predicated region
      $region65: #{tpu_custom_call.1} parent=5 // pred_check
        %p1917 = pneg %p1916
      $region66: #{tpu_custom_call.1} parent=5 // pred_check_branch
        %1919 = sbr.rel (%p1917) target = $region68
      $region67: #{tpu_custom_call.1} parent=5 // pred_region
        %s1920 = ssub.s32 %s15, 2
      $region68: #{tpu_custom_call.1} parent=5 // pred_fallthru
        _
    $region6: #{tpu_custom_call.1} parent=1 // loop_footer
      %s19 = sadd.s32 1, %s15
    $region7: #{tpu_custom_call.1} parent=1 // loop_footer_branch
      %14 = sbr.rel target = $region3
    $region8: #{tpu_custom_call.1} parent=1 // loop_exit
      _
    %1921 = vsyncpa [#allocation4], 1
    %s1922 = scalar_lea.sflag [#allocation4], 1
    %1923 = vsyncpa %s1922, 1
    %1924 = vsyncpa [#allocation7], 1
    %1925 = vsyncpa [#allocation5], 1
    %s1926 = scalar_lea.sflag [#allocation5], 1
    %1927 = vsyncpa %s1926, 1

</llo_original>
